<compile_context>
chip_gen: v7x
topology: tpu7x:2x2x1
jax: 0.10.0
libtpu: 0.0.40
codegen_flags: <defaults>
</compile_context>

<pallas_src>
import jax
import jax.numpy as jnp
from jax.experimental import pallas as pl
from jax.experimental.pallas import tpu as pltpu

BATCH_NUM = 20


def grunn_kernel(x_ref, wih_ref, whh_ref, bi_ref, bhn_ref, wfc_ref, bfc_ref,
                 y_ref, h_all_ref):
    """Whole-sequence GRU (batch row 0 only) + fused output Linear.

    x_ref   : (S, BATCH_NUM) raw inputs; only column 0 is consumed downstream
    wih_ref : (1, 3H)  input->hidden weights, gate-stacked (r, z, n)
    whh_ref : (H, 3H)  hidden->hidden weights, gate-stacked, pre-transposed
    bi_ref  : (1, 3H)  [b_ir + b_hr, b_iz + b_hz, b_in]  (r/z biases pre-summed)
    bhn_ref : (1, H)   b_hn (kept separate: it is multiplied by r)
    wfc_ref : (1, H)   Linear weight (output_size == 1)
    bfc_ref : (1, 1)   Linear bias
    y_ref   : (1, S)   lane-dense per-step outputs for batch row 0
    h_all_ref : (S, H) VMEM scratch slab of hidden states
    """
    S = x_ref.shape[0]
    H = whh_ref.shape[0]

    whh = whh_ref[...]                                   # (H, 3H), loaded once
    bhn = bhn_ref[...]                                   # (1, H)

    # Input projection for every time step at once (input_size == 1 -> broadcast
    # multiply), with the r/z biases already folded in.  Batch row 0 only (GRU
    # batch rows are independent; the module narrows to row 0).
    x0 = x_ref[:, 0:1]                                   # (S, 1)
    gi_all = x0 * wih_ref[...] + bi_ref[...]             # (S, 3H)

    h = jnp.zeros((1, H), jnp.float32)
    # Static unroll: S is small and compile-time.  (Switch to lax.fori_loop
    # with unroll=k if S ever grows large.)
    for t in range(S):
        gi = gi_all[t:t + 1, :]                          # (1, 3H) static sublane slice (off-chain)
        # Single fused MXU pass for all three hidden projections.
        gh = jnp.dot(h, whh, preferred_element_type=jnp.float32)   # (1, 3H)
        # One EUP sigmoid over the contiguous r|z lanes instead of two calls.
        rz = jax.nn.sigmoid(gi[:, 0:2 * H] + gh[:, 0:2 * H])       # (1, 2H)
        r = rz[:, 0:H]
        z = rz[:, H:2 * H]
        # The "+ bhn" add is independent of the sigmoid result, so it hides
        # under the EUP latency (free filler) -- no need to fold it into the dot.
        n = jnp.tanh(gi[:, 2 * H:] + r * (gh[:, 2 * H:] + bhn))
        h = (1.0 - z) * n + z * h
        h_all_ref[t:t + 1, :] = h                        # off-chain VMEM scratch store

    # Fused forwardCalculation Linear (output_size == 1) as one MXU contraction
    # over H -> lane-dense (1, S) row, single contiguous output store.
    y_ref[...] = jax.lax.dot_general(
        wfc_ref[...], h_all_ref[...],
        dimension_numbers=(((1,), (1,)), ((), ())),
        preferred_element_type=jnp.float32) + bfc_ref[...]          # (1, S)


def pack_params(params):
    """One-time parameter packing (gate stacking / transpose / bias pre-sums).

    Keep this OUT of the per-call hot path: at S=8, H=32 the kernel is
    sub-microsecond and re-running this glue every call would dominate.
    """
    w_ih, w_hh = params["w_ih"], params["w_hh"]          # (3H, 1), (3H, H)
    b_ih, b_hh = params["b_ih"], params["b_hh"]          # (3H,),   (3H,)
    w_fc, b_fc = params["w_fc"], params["b_fc"]          # (1, H),  (1,)

    H = w_hh.shape[1]
    assert w_ih.shape == (3 * H, 1), "module forward implies input_size == 1"
    assert w_fc.shape[0] == 1, "module forward implies output_size == 1"

    b_r = b_ih[0:H] + b_hh[0:H]
    b_z = b_ih[H:2 * H] + b_hh[H:2 * H]
    b_n = b_ih[2 * H:3 * H]
    return {
        "wih": jnp.asarray(w_ih, jnp.float32).reshape(1, 3 * H),     # (1, 3H)
        "whh": jnp.asarray(w_hh, jnp.float32).T,                     # (H, 3H)
        "bi": jnp.concatenate([b_r, b_z, b_n]).astype(jnp.float32).reshape(1, 3 * H),
        "bhn": jnp.asarray(b_hh[2 * H:3 * H], jnp.float32).reshape(1, H),
        "wfc": jnp.asarray(w_fc, jnp.float32).reshape(1, H),
        "bfc": jnp.asarray(b_fc, jnp.float32).reshape(1, 1),
    }


def grunn_forward(x, packed):
    """x: (S, BATCH_NUM) float32; packed: output of pack_params. Returns (S,)."""
    S = x.shape[0]
    H = packed["whh"].shape[0]
    x2 = x.reshape(S, BATCH_NUM).astype(jnp.float32)

    def full(shape):
        return pl.BlockSpec(shape, lambda i, _n=len(shape): (0,) * _n)

    y = pl.pallas_call(
        grunn_kernel,
        out_shape=jax.ShapeDtypeStruct((1, S), jnp.float32),
        grid=(1,),                                       # single invocation
        in_specs=[
            full((S, BATCH_NUM)),    # raw inputs (row 0 sliced in-kernel)
            full((1, 3 * H)),        # W_ih (stacked)
            full((H, 3 * H)),        # W_hh (stacked, transposed)
            full((1, 3 * H)),        # combined r/z/n biases
            full((1, H)),            # b_hn
            full((1, H)),            # W_fc
            full((1, 1)),            # b_fc
        ],
        out_specs=full((1, S)),                          # lane-dense output row
        scratch_shapes=[pltpu.VMEM((S, H), jnp.float32)],   # hidden-state slab
    )(x2, packed["wih"], packed["whh"], packed["bi"], packed["bhn"],
      packed["wfc"], packed["bfc"])

    # torch: narrow(1, 0, 1).squeeze(-1).squeeze(-1) -> (S,)
    return y[0, :]


def grunn_reference(x, params):
    """Pure-JAX reference (mirrors torch.nn.GRU + Linear, full batch), for validation."""
    S = x.shape[0]
    x3 = x.reshape(S, BATCH_NUM, 1).astype(jnp.float32)
    w_ih, w_hh = params["w_ih"], params["w_hh"]
    b_ih, b_hh = params["b_ih"], params["b_hh"]
    H = w_hh.shape[1]

    def step(h, x_t):
        gi = x_t @ w_ih.T + b_ih
        gh = h @ w_hh.T + b_hh
        i_r, i_z, i_n = jnp.split(gi, 3, axis=-1)
        h_r, h_z, h_n = jnp.split(gh, 3, axis=-1)
        r = jax.nn.sigmoid(i_r + h_r)
        z = jax.nn.sigmoid(i_z + h_z)
        n = jnp.tanh(i_n + r * h_n)
        h_new = (1.0 - z) * n + z * h
        return h_new, h_new

    h0 = jnp.zeros((BATCH_NUM, H), jnp.float32)
    _, hs = jax.lax.scan(step, h0, x3)                   # (S, B, H)
    y = hs @ params["w_fc"].T + params["b_fc"]           # (S, B, 1)
    return y[:, 0, 0]


def init_params(key, input_size=1, hidden_size=32, output_size=1):
    """Deterministic init matching PyTorch param shapes (uniform +/- 1/sqrt(H))."""
    ks = jax.random.split(key, 6)
    bound = 1.0 / jnp.sqrt(jnp.float32(hidden_size))
    u = lambda k, shape: jax.random.uniform(k, shape, jnp.float32, -bound, bound)
    return {
        "w_ih": u(ks[0], (3 * hidden_size, input_size)),
        "w_hh": u(ks[1], (3 * hidden_size, hidden_size)),
        "b_ih": u(ks[2], (3 * hidden_size,)),
        "b_hh": u(ks[3], (3 * hidden_size,)),
        "w_fc": u(ks[4], (output_size, hidden_size)),
        "b_fc": u(ks[5], (output_size,)),
    }


if __name__ == "__main__":
    S = 8            # sequence length (len(_x))
    H = 32           # hidden_size

    key = jax.random.PRNGKey(0)
    kx, kp = jax.random.split(key)
    params = init_params(kp, input_size=1, hidden_size=H, output_size=1)
    x = jax.random.normal(kx, (S, BATCH_NUM), jnp.float32)

    packed = pack_params(params)                         # one-time packing, off hot path
    fwd = jax.jit(grunn_forward)

    out = jax.block_until_ready(fwd(x, packed))
    ref = jax.block_until_ready(grunn_reference(x, params))

    assert out.shape == (S,), out.shape
    assert jnp.allclose(out, ref, rtol=1e-4, atol=1e-4), (out, ref)

    print("KERNEL_OK")
</pallas_src>

<mosaic_0001>
module attributes {stable_mosaic.version = 11 : i64} {
  func.func @grunn_kernel(%arg0: i32, %arg1: memref<8x20xf32, #tpu.memory_space<vmem>>, %arg2: memref<1x96xf32, #tpu.memory_space<vmem>>, %arg3: memref<32x96xf32, #tpu.memory_space<vmem>>, %arg4: memref<1x96xf32, #tpu.memory_space<vmem>>, %arg5: memref<1x32xf32, #tpu.memory_space<vmem>>, %arg6: memref<1x32xf32, #tpu.memory_space<vmem>>, %arg7: memref<1x1xf32, #tpu.memory_space<vmem>>, %arg8: memref<1x8xf32, #tpu.memory_space<vmem>>, %arg9: memref<8x32xf32, #tpu.memory_space<vmem>>) attributes {dimension_semantics = [#tpu.dimension_semantics<arbitrary>], iteration_bounds = array<i64: 1>, scalar_prefetch = 0 : i64, scratch_operands = 1 : i64, tpu.core_type = #tpu.core_type<tc>, window_params = [{pipeline_mode = #tpu.pipeline_mode<synchronous>, transform_indices = @transform_0, window_bounds = array<i64: 8, 20>}, {pipeline_mode = #tpu.pipeline_mode<synchronous>, transform_indices = @transform_1, window_bounds = array<i64: 1, 96>}, {pipeline_mode = #tpu.pipeline_mode<synchronous>, transform_indices = @transform_2, window_bounds = array<i64: 32, 96>}, {pipeline_mode = #tpu.pipeline_mode<synchronous>, transform_indices = @transform_3, window_bounds = array<i64: 1, 96>}, {pipeline_mode = #tpu.pipeline_mode<synchronous>, transform_indices = @transform_4, window_bounds = array<i64: 1, 32>}, {pipeline_mode = #tpu.pipeline_mode<synchronous>, transform_indices = @transform_5, window_bounds = array<i64: 1, 32>}, {pipeline_mode = #tpu.pipeline_mode<synchronous>, transform_indices = @transform_6, window_bounds = array<i64: 1, 1>}, {pipeline_mode = #tpu.pipeline_mode<synchronous>, transform_indices = @transform_7, window_bounds = array<i64: 1, 8>}]} {
    %c0 = arith.constant 0 : index
    %c0_0 = arith.constant 0 : index
    %0 = vector.load %arg3[%c0, %c0_0] : memref<32x96xf32, #tpu.memory_space<vmem>>, vector<32x96xf32>
    %c0_1 = arith.constant 0 : index
    %c0_2 = arith.constant 0 : index
    %1 = vector.load %arg5[%c0_1, %c0_2] : memref<1x32xf32, #tpu.memory_space<vmem>>, vector<1x32xf32>
    %c0_3 = arith.constant 0 : index
    %c0_4 = arith.constant 0 : index
    %2 = vector.load %arg1[%c0_3, %c0_4] : memref<8x20xf32, #tpu.memory_space<vmem>>, vector<8x1xf32>
    %c0_5 = arith.constant 0 : index
    %c0_6 = arith.constant 0 : index
    %3 = vector.load %arg2[%c0_5, %c0_6] : memref<1x96xf32, #tpu.memory_space<vmem>>, vector<1x96xf32>
    %4 = vector.broadcast %2 : vector<8x1xf32> to vector<8x96xf32>
    %5 = vector.broadcast %3 : vector<1x96xf32> to vector<8x96xf32>
    %6 = arith.mulf %4, %5 : vector<8x96xf32>
    %c0_7 = arith.constant 0 : index
    %c0_8 = arith.constant 0 : index
    %7 = vector.load %arg4[%c0_7, %c0_8] : memref<1x96xf32, #tpu.memory_space<vmem>>, vector<1x96xf32>
    %8 = vector.broadcast %7 : vector<1x96xf32> to vector<8x96xf32>
    %9 = arith.addf %6, %8 : vector<8x96xf32>
    %cst = arith.constant 0.000000e+00 : f32
    %10 = vector.broadcast %cst : f32 to vector<1x32xf32>
    %11 = vector.extract_strided_slice %9 {offsets = [0, 0], sizes = [1, 96], strides = [1, 1]} : vector<8x96xf32> to vector<1x96xf32>
    %cst_9 = arith.constant dense<0.000000e+00> : vector<1x96xf32>
    %12 = tpu.matmul %10, %0, %cst_9 {dimension_numbers = #tpu.dot_dimension_numbers<[1], [0], [0], [1], [0, 0, 1, 1], [], []>} : vector<1x32xf32>, vector<32x96xf32>, vector<1x96xf32> -> vector<1x96xf32>
    %13 = vector.extract_strided_slice %11 {offsets = [0, 0], sizes = [1, 64], strides = [1, 1]} : vector<1x96xf32> to vector<1x64xf32>
    %14 = vector.extract_strided_slice %12 {offsets = [0, 0], sizes = [1, 64], strides = [1, 1]} : vector<1x96xf32> to vector<1x64xf32>
    %15 = arith.addf %13, %14 : vector<1x64xf32>
    %16 = arith.negf %15 : vector<1x64xf32>
    %17 = math.exp %16 : vector<1x64xf32>
    %cst_10 = arith.constant 1.000000e+00 : f32
    %18 = vector.broadcast %cst_10 : f32 to vector<1x64xf32>
    %19 = arith.addf %18, %17 : vector<1x64xf32>
    %20 = arith.divf %18, %19 : vector<1x64xf32>
    %21 = vector.extract_strided_slice %20 {offsets = [0, 0], sizes = [1, 32], strides = [1, 1]} : vector<1x64xf32> to vector<1x32xf32>
    %22 = vector.extract_strided_slice %20 {offsets = [0, 32], sizes = [1, 32], strides = [1, 1]} : vector<1x64xf32> to vector<1x32xf32>
    %23 = vector.extract_strided_slice %11 {offsets = [0, 64], sizes = [1, 32], strides = [1, 1]} : vector<1x96xf32> to vector<1x32xf32>
    %24 = vector.extract_strided_slice %12 {offsets = [0, 64], sizes = [1, 32], strides = [1, 1]} : vector<1x96xf32> to vector<1x32xf32>
    %25 = arith.addf %24, %1 : vector<1x32xf32>
    %26 = arith.mulf %21, %25 : vector<1x32xf32>
    %27 = arith.addf %23, %26 : vector<1x32xf32>
    %28 = math.tanh %27 : vector<1x32xf32>
    %cst_11 = arith.constant 1.000000e+00 : f32
    %29 = vector.broadcast %cst_11 : f32 to vector<1x32xf32>
    %30 = arith.subf %29, %22 : vector<1x32xf32>
    %31 = arith.mulf %30, %28 : vector<1x32xf32>
    %32 = arith.mulf %22, %10 : vector<1x32xf32>
    %33 = arith.addf %31, %32 : vector<1x32xf32>
    %c0_12 = arith.constant 0 : index
    %c0_13 = arith.constant 0 : index
    %34 = vector.load %arg9[%c0_12, %c0_13] : memref<8x32xf32, #tpu.memory_space<vmem>>, vector<1x32xf32>
    tpu.vector_store %arg9[%c0_12, %c0_13], %33 {strides = array<i32>} : memref<8x32xf32, #tpu.memory_space<vmem>>, vector<1x32xf32>,
    %35 = vector.extract_strided_slice %9 {offsets = [1, 0], sizes = [1, 96], strides = [1, 1]} : vector<8x96xf32> to vector<1x96xf32>
    %cst_14 = arith.constant dense<0.000000e+00> : vector<1x96xf32>
    %36 = tpu.matmul %33, %0, %cst_14 {dimension_numbers = #tpu.dot_dimension_numbers<[1], [0], [0], [1], [0, 0, 1, 1], [], []>} : vector<1x32xf32>, vector<32x96xf32>, vector<1x96xf32> -> vector<1x96xf32>
    %37 = vector.extract_strided_slice %35 {offsets = [0, 0], sizes = [1, 64], strides = [1, 1]} : vector<1x96xf32> to vector<1x64xf32>
    %38 = vector.extract_strided_slice %36 {offsets = [0, 0], sizes = [1, 64], strides = [1, 1]} : vector<1x96xf32> to vector<1x64xf32>
    %39 = arith.addf %37, %38 : vector<1x64xf32>
    %40 = arith.negf %39 : vector<1x64xf32>
    %41 = math.exp %40 : vector<1x64xf32>
    %cst_15 = arith.constant 1.000000e+00 : f32
    %42 = vector.broadcast %cst_15 : f32 to vector<1x64xf32>
    %43 = arith.addf %42, %41 : vector<1x64xf32>
    %44 = arith.divf %42, %43 : vector<1x64xf32>
    %45 = vector.extract_strided_slice %44 {offsets = [0, 0], sizes = [1, 32], strides = [1, 1]} : vector<1x64xf32> to vector<1x32xf32>
    %46 = vector.extract_strided_slice %44 {offsets = [0, 32], sizes = [1, 32], strides = [1, 1]} : vector<1x64xf32> to vector<1x32xf32>
    %47 = vector.extract_strided_slice %35 {offsets = [0, 64], sizes = [1, 32], strides = [1, 1]} : vector<1x96xf32> to vector<1x32xf32>
    %48 = vector.extract_strided_slice %36 {offsets = [0, 64], sizes = [1, 32], strides = [1, 1]} : vector<1x96xf32> to vector<1x32xf32>
    %49 = arith.addf %48, %1 : vector<1x32xf32>
    %50 = arith.mulf %45, %49 : vector<1x32xf32>
    %51 = arith.addf %47, %50 : vector<1x32xf32>
    %52 = math.tanh %51 : vector<1x32xf32>
    %cst_16 = arith.constant 1.000000e+00 : f32
    %53 = vector.broadcast %cst_16 : f32 to vector<1x32xf32>
    %54 = arith.subf %53, %46 : vector<1x32xf32>
    %55 = arith.mulf %54, %52 : vector<1x32xf32>
    %56 = arith.mulf %46, %33 : vector<1x32xf32>
    %57 = arith.addf %55, %56 : vector<1x32xf32>
    %c1 = arith.constant 1 : index
    %c0_17 = arith.constant 0 : index
    %58 = vector.load %arg9[%c1, %c0_17] : memref<8x32xf32, #tpu.memory_space<vmem>>, vector<1x32xf32>
    tpu.vector_store %arg9[%c1, %c0_17], %57 {strides = array<i32>} : memref<8x32xf32, #tpu.memory_space<vmem>>, vector<1x32xf32>,
    %59 = vector.extract_strided_slice %9 {offsets = [2, 0], sizes = [1, 96], strides = [1, 1]} : vector<8x96xf32> to vector<1x96xf32>
    %cst_18 = arith.constant dense<0.000000e+00> : vector<1x96xf32>
    %60 = tpu.matmul %57, %0, %cst_18 {dimension_numbers = #tpu.dot_dimension_numbers<[1], [0], [0], [1], [0, 0, 1, 1], [], []>} : vector<1x32xf32>, vector<32x96xf32>, vector<1x96xf32> -> vector<1x96xf32>
    %61 = vector.extract_strided_slice %59 {offsets = [0, 0], sizes = [1, 64], strides = [1, 1]} : vector<1x96xf32> to vector<1x64xf32>
    %62 = vector.extract_strided_slice %60 {offsets = [0, 0], sizes = [1, 64], strides = [1, 1]} : vector<1x96xf32> to vector<1x64xf32>
    %63 = arith.addf %61, %62 : vector<1x64xf32>
    %64 = arith.negf %63 : vector<1x64xf32>
    %65 = math.exp %64 : vector<1x64xf32>
    %cst_19 = arith.constant 1.000000e+00 : f32
    %66 = vector.broadcast %cst_19 : f32 to vector<1x64xf32>
    %67 = arith.addf %66, %65 : vector<1x64xf32>
    %68 = arith.divf %66, %67 : vector<1x64xf32>
    %69 = vector.extract_strided_slice %68 {offsets = [0, 0], sizes = [1, 32], strides = [1, 1]} : vector<1x64xf32> to vector<1x32xf32>
    %70 = vector.extract_strided_slice %68 {offsets = [0, 32], sizes = [1, 32], strides = [1, 1]} : vector<1x64xf32> to vector<1x32xf32>
    %71 = vector.extract_strided_slice %59 {offsets = [0, 64], sizes = [1, 32], strides = [1, 1]} : vector<1x96xf32> to vector<1x32xf32>
    %72 = vector.extract_strided_slice %60 {offsets = [0, 64], sizes = [1, 32], strides = [1, 1]} : vector<1x96xf32> to vector<1x32xf32>
    %73 = arith.addf %72, %1 : vector<1x32xf32>
    %74 = arith.mulf %69, %73 : vector<1x32xf32>
    %75 = arith.addf %71, %74 : vector<1x32xf32>
    %76 = math.tanh %75 : vector<1x32xf32>
    %cst_20 = arith.constant 1.000000e+00 : f32
    %77 = vector.broadcast %cst_20 : f32 to vector<1x32xf32>
    %78 = arith.subf %77, %70 : vector<1x32xf32>
    %79 = arith.mulf %78, %76 : vector<1x32xf32>
    %80 = arith.mulf %70, %57 : vector<1x32xf32>
    %81 = arith.addf %79, %80 : vector<1x32xf32>
    %c2 = arith.constant 2 : index
    %c0_21 = arith.constant 0 : index
    %82 = vector.load %arg9[%c2, %c0_21] : memref<8x32xf32, #tpu.memory_space<vmem>>, vector<1x32xf32>
    tpu.vector_store %arg9[%c2, %c0_21], %81 {strides = array<i32>} : memref<8x32xf32, #tpu.memory_space<vmem>>, vector<1x32xf32>,
    %83 = vector.extract_strided_slice %9 {offsets = [3, 0], sizes = [1, 96], strides = [1, 1]} : vector<8x96xf32> to vector<1x96xf32>
    %cst_22 = arith.constant dense<0.000000e+00> : vector<1x96xf32>
    %84 = tpu.matmul %81, %0, %cst_22 {dimension_numbers = #tpu.dot_dimension_numbers<[1], [0], [0], [1], [0, 0, 1, 1], [], []>} : vector<1x32xf32>, vector<32x96xf32>, vector<1x96xf32> -> vector<1x96xf32>
    %85 = vector.extract_strided_slice %83 {offsets = [0, 0], sizes = [1, 64], strides = [1, 1]} : vector<1x96xf32> to vector<1x64xf32>
    %86 = vector.extract_strided_slice %84 {offsets = [0, 0], sizes = [1, 64], strides = [1, 1]} : vector<1x96xf32> to vector<1x64xf32>
    %87 = arith.addf %85, %86 : vector<1x64xf32>
    %88 = arith.negf %87 : vector<1x64xf32>
    %89 = math.exp %88 : vector<1x64xf32>
    %cst_23 = arith.constant 1.000000e+00 : f32
    %90 = vector.broadcast %cst_23 : f32 to vector<1x64xf32>
    %91 = arith.addf %90, %89 : vector<1x64xf32>
    %92 = arith.divf %90, %91 : vector<1x64xf32>
    %93 = vector.extract_strided_slice %92 {offsets = [0, 0], sizes = [1, 32], strides = [1, 1]} : vector<1x64xf32> to vector<1x32xf32>
    %94 = vector.extract_strided_slice %92 {offsets = [0, 32], sizes = [1, 32], strides = [1, 1]} : vector<1x64xf32> to vector<1x32xf32>
    %95 = vector.extract_strided_slice %83 {offsets = [0, 64], sizes = [1, 32], strides = [1, 1]} : vector<1x96xf32> to vector<1x32xf32>
    %96 = vector.extract_strided_slice %84 {offsets = [0, 64], sizes = [1, 32], strides = [1, 1]} : vector<1x96xf32> to vector<1x32xf32>
    %97 = arith.addf %96, %1 : vector<1x32xf32>
    %98 = arith.mulf %93, %97 : vector<1x32xf32>
    %99 = arith.addf %95, %98 : vector<1x32xf32>
    %100 = math.tanh %99 : vector<1x32xf32>
    %cst_24 = arith.constant 1.000000e+00 : f32
    %101 = vector.broadcast %cst_24 : f32 to vector<1x32xf32>
    %102 = arith.subf %101, %94 : vector<1x32xf32>
    %103 = arith.mulf %102, %100 : vector<1x32xf32>
    %104 = arith.mulf %94, %81 : vector<1x32xf32>
    %105 = arith.addf %103, %104 : vector<1x32xf32>
    %c3 = arith.constant 3 : index
    %c0_25 = arith.constant 0 : index
    %106 = vector.load %arg9[%c3, %c0_25] : memref<8x32xf32, #tpu.memory_space<vmem>>, vector<1x32xf32>
    tpu.vector_store %arg9[%c3, %c0_25], %105 {strides = array<i32>} : memref<8x32xf32, #tpu.memory_space<vmem>>, vector<1x32xf32>,
    %107 = vector.extract_strided_slice %9 {offsets = [4, 0], sizes = [1, 96], strides = [1, 1]} : vector<8x96xf32> to vector<1x96xf32>
    %cst_26 = arith.constant dense<0.000000e+00> : vector<1x96xf32>
    %108 = tpu.matmul %105, %0, %cst_26 {dimension_numbers = #tpu.dot_dimension_numbers<[1], [0], [0], [1], [0, 0, 1, 1], [], []>} : vector<1x32xf32>, vector<32x96xf32>, vector<1x96xf32> -> vector<1x96xf32>
    %109 = vector.extract_strided_slice %107 {offsets = [0, 0], sizes = [1, 64], strides = [1, 1]} : vector<1x96xf32> to vector<1x64xf32>
    %110 = vector.extract_strided_slice %108 {offsets = [0, 0], sizes = [1, 64], strides = [1, 1]} : vector<1x96xf32> to vector<1x64xf32>
    %111 = arith.addf %109, %110 : vector<1x64xf32>
    %112 = arith.negf %111 : vector<1x64xf32>
    %113 = math.exp %112 : vector<1x64xf32>
    %cst_27 = arith.constant 1.000000e+00 : f32
    %114 = vector.broadcast %cst_27 : f32 to vector<1x64xf32>
    %115 = arith.addf %114, %113 : vector<1x64xf32>
    %116 = arith.divf %114, %115 : vector<1x64xf32>
    %117 = vector.extract_strided_slice %116 {offsets = [0, 0], sizes = [1, 32], strides = [1, 1]} : vector<1x64xf32> to vector<1x32xf32>
    %118 = vector.extract_strided_slice %116 {offsets = [0, 32], sizes = [1, 32], strides = [1, 1]} : vector<1x64xf32> to vector<1x32xf32>
    %119 = vector.extract_strided_slice %107 {offsets = [0, 64], sizes = [1, 32], strides = [1, 1]} : vector<1x96xf32> to vector<1x32xf32>
    %120 = vector.extract_strided_slice %108 {offsets = [0, 64], sizes = [1, 32], strides = [1, 1]} : vector<1x96xf32> to vector<1x32xf32>
    %121 = arith.addf %120, %1 : vector<1x32xf32>
    %122 = arith.mulf %117, %121 : vector<1x32xf32>
    %123 = arith.addf %119, %122 : vector<1x32xf32>
    %124 = math.tanh %123 : vector<1x32xf32>
    %cst_28 = arith.constant 1.000000e+00 : f32
    %125 = vector.broadcast %cst_28 : f32 to vector<1x32xf32>
    %126 = arith.subf %125, %118 : vector<1x32xf32>
    %127 = arith.mulf %126, %124 : vector<1x32xf32>
    %128 = arith.mulf %118, %105 : vector<1x32xf32>
    %129 = arith.addf %127, %128 : vector<1x32xf32>
    %c4 = arith.constant 4 : index
    %c0_29 = arith.constant 0 : index
    %130 = vector.load %arg9[%c4, %c0_29] : memref<8x32xf32, #tpu.memory_space<vmem>>, vector<1x32xf32>
    tpu.vector_store %arg9[%c4, %c0_29], %129 {strides = array<i32>} : memref<8x32xf32, #tpu.memory_space<vmem>>, vector<1x32xf32>,
    %131 = vector.extract_strided_slice %9 {offsets = [5, 0], sizes = [1, 96], strides = [1, 1]} : vector<8x96xf32> to vector<1x96xf32>
    %cst_30 = arith.constant dense<0.000000e+00> : vector<1x96xf32>
    %132 = tpu.matmul %129, %0, %cst_30 {dimension_numbers = #tpu.dot_dimension_numbers<[1], [0], [0], [1], [0, 0, 1, 1], [], []>} : vector<1x32xf32>, vector<32x96xf32>, vector<1x96xf32> -> vector<1x96xf32>
    %133 = vector.extract_strided_slice %131 {offsets = [0, 0], sizes = [1, 64], strides = [1, 1]} : vector<1x96xf32> to vector<1x64xf32>
    %134 = vector.extract_strided_slice %132 {offsets = [0, 0], sizes = [1, 64], strides = [1, 1]} : vector<1x96xf32> to vector<1x64xf32>
    %135 = arith.addf %133, %134 : vector<1x64xf32>
    %136 = arith.negf %135 : vector<1x64xf32>
    %137 = math.exp %136 : vector<1x64xf32>
    %cst_31 = arith.constant 1.000000e+00 : f32
    %138 = vector.broadcast %cst_31 : f32 to vector<1x64xf32>
    %139 = arith.addf %138, %137 : vector<1x64xf32>
    %140 = arith.divf %138, %139 : vector<1x64xf32>
    %141 = vector.extract_strided_slice %140 {offsets = [0, 0], sizes = [1, 32], strides = [1, 1]} : vector<1x64xf32> to vector<1x32xf32>
    %142 = vector.extract_strided_slice %140 {offsets = [0, 32], sizes = [1, 32], strides = [1, 1]} : vector<1x64xf32> to vector<1x32xf32>
    %143 = vector.extract_strided_slice %131 {offsets = [0, 64], sizes = [1, 32], strides = [1, 1]} : vector<1x96xf32> to vector<1x32xf32>
    %144 = vector.extract_strided_slice %132 {offsets = [0, 64], sizes = [1, 32], strides = [1, 1]} : vector<1x96xf32> to vector<1x32xf32>
    %145 = arith.addf %144, %1 : vector<1x32xf32>
    %146 = arith.mulf %141, %145 : vector<1x32xf32>
    %147 = arith.addf %143, %146 : vector<1x32xf32>
    %148 = math.tanh %147 : vector<1x32xf32>
    %cst_32 = arith.constant 1.000000e+00 : f32
    %149 = vector.broadcast %cst_32 : f32 to vector<1x32xf32>
    %150 = arith.subf %149, %142 : vector<1x32xf32>
    %151 = arith.mulf %150, %148 : vector<1x32xf32>
    %152 = arith.mulf %142, %129 : vector<1x32xf32>
    %153 = arith.addf %151, %152 : vector<1x32xf32>
    %c5 = arith.constant 5 : index
    %c0_33 = arith.constant 0 : index
    %154 = vector.load %arg9[%c5, %c0_33] : memref<8x32xf32, #tpu.memory_space<vmem>>, vector<1x32xf32>
    tpu.vector_store %arg9[%c5, %c0_33], %153 {strides = array<i32>} : memref<8x32xf32, #tpu.memory_space<vmem>>, vector<1x32xf32>,
    %155 = vector.extract_strided_slice %9 {offsets = [6, 0], sizes = [1, 96], strides = [1, 1]} : vector<8x96xf32> to vector<1x96xf32>
    %cst_34 = arith.constant dense<0.000000e+00> : vector<1x96xf32>
    %156 = tpu.matmul %153, %0, %cst_34 {dimension_numbers = #tpu.dot_dimension_numbers<[1], [0], [0], [1], [0, 0, 1, 1], [], []>} : vector<1x32xf32>, vector<32x96xf32>, vector<1x96xf32> -> vector<1x96xf32>
    %157 = vector.extract_strided_slice %155 {offsets = [0, 0], sizes = [1, 64], strides = [1, 1]} : vector<1x96xf32> to vector<1x64xf32>
    %158 = vector.extract_strided_slice %156 {offsets = [0, 0], sizes = [1, 64], strides = [1, 1]} : vector<1x96xf32> to vector<1x64xf32>
    %159 = arith.addf %157, %158 : vector<1x64xf32>
    %160 = arith.negf %159 : vector<1x64xf32>
    %161 = math.exp %160 : vector<1x64xf32>
    %cst_35 = arith.constant 1.000000e+00 : f32
    %162 = vector.broadcast %cst_35 : f32 to vector<1x64xf32>
    %163 = arith.addf %162, %161 : vector<1x64xf32>
    %164 = arith.divf %162, %163 : vector<1x64xf32>
    %165 = vector.extract_strided_slice %164 {offsets = [0, 0], sizes = [1, 32], strides = [1, 1]} : vector<1x64xf32> to vector<1x32xf32>
    %166 = vector.extract_strided_slice %164 {offsets = [0, 32], sizes = [1, 32], strides = [1, 1]} : vector<1x64xf32> to vector<1x32xf32>
    %167 = vector.extract_strided_slice %155 {offsets = [0, 64], sizes = [1, 32], strides = [1, 1]} : vector<1x96xf32> to vector<1x32xf32>
    %168 = vector.extract_strided_slice %156 {offsets = [0, 64], sizes = [1, 32], strides = [1, 1]} : vector<1x96xf32> to vector<1x32xf32>
    %169 = arith.addf %168, %1 : vector<1x32xf32>
    %170 = arith.mulf %165, %169 : vector<1x32xf32>
    %171 = arith.addf %167, %170 : vector<1x32xf32>
    %172 = math.tanh %171 : vector<1x32xf32>
    %cst_36 = arith.constant 1.000000e+00 : f32
    %173 = vector.broadcast %cst_36 : f32 to vector<1x32xf32>
    %174 = arith.subf %173, %166 : vector<1x32xf32>
    %175 = arith.mulf %174, %172 : vector<1x32xf32>
    %176 = arith.mulf %166, %153 : vector<1x32xf32>
    %177 = arith.addf %175, %176 : vector<1x32xf32>
    %c6 = arith.constant 6 : index
    %c0_37 = arith.constant 0 : index
    %178 = vector.load %arg9[%c6, %c0_37] : memref<8x32xf32, #tpu.memory_space<vmem>>, vector<1x32xf32>
    tpu.vector_store %arg9[%c6, %c0_37], %177 {strides = array<i32>} : memref<8x32xf32, #tpu.memory_space<vmem>>, vector<1x32xf32>,
    %179 = vector.extract_strided_slice %9 {offsets = [7, 0], sizes = [1, 96], strides = [1, 1]} : vector<8x96xf32> to vector<1x96xf32>
    %cst_38 = arith.constant dense<0.000000e+00> : vector<1x96xf32>
    %180 = tpu.matmul %177, %0, %cst_38 {dimension_numbers = #tpu.dot_dimension_numbers<[1], [0], [0], [1], [0, 0, 1, 1], [], []>} : vector<1x32xf32>, vector<32x96xf32>, vector<1x96xf32> -> vector<1x96xf32>
    %181 = vector.extract_strided_slice %179 {offsets = [0, 0], sizes = [1, 64], strides = [1, 1]} : vector<1x96xf32> to vector<1x64xf32>
    %182 = vector.extract_strided_slice %180 {offsets = [0, 0], sizes = [1, 64], strides = [1, 1]} : vector<1x96xf32> to vector<1x64xf32>
    %183 = arith.addf %181, %182 : vector<1x64xf32>
    %184 = arith.negf %183 : vector<1x64xf32>
    %185 = math.exp %184 : vector<1x64xf32>
    %cst_39 = arith.constant 1.000000e+00 : f32
    %186 = vector.broadcast %cst_39 : f32 to vector<1x64xf32>
    %187 = arith.addf %186, %185 : vector<1x64xf32>
    %188 = arith.divf %186, %187 : vector<1x64xf32>
    %189 = vector.extract_strided_slice %188 {offsets = [0, 0], sizes = [1, 32], strides = [1, 1]} : vector<1x64xf32> to vector<1x32xf32>
    %190 = vector.extract_strided_slice %188 {offsets = [0, 32], sizes = [1, 32], strides = [1, 1]} : vector<1x64xf32> to vector<1x32xf32>
    %191 = vector.extract_strided_slice %179 {offsets = [0, 64], sizes = [1, 32], strides = [1, 1]} : vector<1x96xf32> to vector<1x32xf32>
    %192 = vector.extract_strided_slice %180 {offsets = [0, 64], sizes = [1, 32], strides = [1, 1]} : vector<1x96xf32> to vector<1x32xf32>
    %193 = arith.addf %192, %1 : vector<1x32xf32>
    %194 = arith.mulf %189, %193 : vector<1x32xf32>
    %195 = arith.addf %191, %194 : vector<1x32xf32>
    %196 = math.tanh %195 : vector<1x32xf32>
    %cst_40 = arith.constant 1.000000e+00 : f32
    %197 = vector.broadcast %cst_40 : f32 to vector<1x32xf32>
    %198 = arith.subf %197, %190 : vector<1x32xf32>
    %199 = arith.mulf %198, %196 : vector<1x32xf32>
    %200 = arith.mulf %190, %177 : vector<1x32xf32>
    %201 = arith.addf %199, %200 : vector<1x32xf32>
    %c7 = arith.constant 7 : index
    %c0_41 = arith.constant 0 : index
    %202 = vector.load %arg9[%c7, %c0_41] : memref<8x32xf32, #tpu.memory_space<vmem>>, vector<1x32xf32>
    tpu.vector_store %arg9[%c7, %c0_41], %201 {strides = array<i32>} : memref<8x32xf32, #tpu.memory_space<vmem>>, vector<1x32xf32>,
    %c0_42 = arith.constant 0 : index
    %c0_43 = arith.constant 0 : index
    %203 = vector.load %arg6[%c0_42, %c0_43] : memref<1x32xf32, #tpu.memory_space<vmem>>, vector<1x32xf32>
    %c0_44 = arith.constant 0 : index
    %c0_45 = arith.constant 0 : index
    %204 = vector.load %arg9[%c0_44, %c0_45] : memref<8x32xf32, #tpu.memory_space<vmem>>, vector<8x32xf32>
    %cst_46 = arith.constant dense<0.000000e+00> : vector<1x8xf32>
    %205 = tpu.matmul %203, %204, %cst_46 {dimension_numbers = #tpu.dot_dimension_numbers<[1], [1], [0], [0], [0, 0, 1, 0], [], []>} : vector<1x32xf32>, vector<8x32xf32>, vector<1x8xf32> -> vector<1x8xf32>
    %c0_47 = arith.constant 0 : index
    %c0_48 = arith.constant 0 : index
    %206 = vector.load %arg7[%c0_47, %c0_48] : memref<1x1xf32, #tpu.memory_space<vmem>>, vector<1x1xf32>
    %207 = vector.broadcast %206 : vector<1x1xf32> to vector<1x8xf32>
    %208 = arith.addf %205, %207 : vector<1x8xf32>
    %c0_49 = arith.constant 0 : index
    %c0_50 = arith.constant 0 : index
    %209 = vector.load %arg8[%c0_49, %c0_50] : memref<1x8xf32, #tpu.memory_space<vmem>>, vector<1x8xf32>
    tpu.vector_store %arg8[%c0_49, %c0_50], %208 {strides = array<i32>} : memref<1x8xf32, #tpu.memory_space<vmem>>, vector<1x8xf32>,
    return
  }
  func.func @transform_0(%arg0: i32) -> (i32, i32) {
    %c0_i32 = arith.constant 0 : i32
    %c0_i32_0 = arith.constant 0 : i32
    %c0_i32_1 = arith.constant 0 : i32
    return %c0_i32, %c0_i32_0 : i32, i32
  }
  func.func @transform_1(%arg0: i32) -> (i32, i32) {
    %c0_i32 = arith.constant 0 : i32
    %c0_i32_0 = arith.constant 0 : i32
    %c0_i32_1 = arith.constant 0 : i32
    return %c0_i32, %c0_i32_0 : i32, i32
  }
  func.func @transform_2(%arg0: i32) -> (i32, i32) {
    %c0_i32 = arith.constant 0 : i32
    %c0_i32_0 = arith.constant 0 : i32
    %c0_i32_1 = arith.constant 0 : i32
    return %c0_i32, %c0_i32_0 : i32, i32
  }
  func.func @transform_3(%arg0: i32) -> (i32, i32) {
    %c0_i32 = arith.constant 0 : i32
    %c0_i32_0 = arith.constant 0 : i32
    %c0_i32_1 = arith.constant 0 : i32
    return %c0_i32, %c0_i32_0 : i32, i32
  }
  func.func @transform_4(%arg0: i32) -> (i32, i32) {
    %c0_i32 = arith.constant 0 : i32
    %c0_i32_0 = arith.constant 0 : i32
    %c0_i32_1 = arith.constant 0 : i32
    return %c0_i32, %c0_i32_0 : i32, i32
  }
  func.func @transform_5(%arg0: i32) -> (i32, i32) {
    %c0_i32 = arith.constant 0 : i32
    %c0_i32_0 = arith.constant 0 : i32
    %c0_i32_1 = arith.constant 0 : i32
    return %c0_i32, %c0_i32_0 : i32, i32
  }
  func.func @transform_6(%arg0: i32) -> (i32, i32) {
    %c0_i32 = arith.constant 0 : i32
    %c0_i32_0 = arith.constant 0 : i32
    %c0_i32_1 = arith.constant 0 : i32
    return %c0_i32, %c0_i32_0 : i32, i32
  }
  func.func @transform_7(%arg0: i32) -> (i32, i32) {
    %c0_i32 = arith.constant 0 : i32
    %c0_i32_0 = arith.constant 0 : i32
    %c0_i32_1 = arith.constant 0 : i32
    return %c0_i32, %c0_i32_0 : i32, i32
  }
}

</mosaic_0001>

<llo_original>
// kernel: grunn_forward.1
$region0: #{grunn_forward.1}
  #allocation0 [shape = 'u32[]', space=smem, size = 0x4, offset = 0x4, fixed_abs, tag = 'smem constant byte address 0x4 - core index']
  #allocation1 [shape = 'u32[144,128]{1,0:T(1,128)}', space=vmem, size = 0x12000, scoped, tag = 'internal scratch']
  #allocation2 [shape = 'f32[8,32]{1,0:T(8,128)}', space=vmem, size = 0x1000, scoped, tag = 'scratch operand']
  #allocation3 [shape = 'f32[1,1]{1,0:T(1,128)S(1)}', space=vmem, size = 0x200, scoped, tag = 'scoped memory for grunn_forward.1']
  %s0 = inlined_call_operand.hbm [shape: f32[8,20], index: 0, kind: input, shape index: {}]
  %s1 = inlined_call_operand.vmem [shape: f32[1,96], index: 1, kind: input, shape index: {}]
  %s2 = inlined_call_operand.hbm [shape: f32[32,96], index: 2, kind: input, shape index: {}]
  %s3 = inlined_call_operand.vmem [shape: f32[1,96], index: 3, kind: input, shape index: {}]
  %s4 = inlined_call_operand.vmem [shape: f32[1,32], index: 4, kind: input, shape index: {}]
  %s5 = inlined_call_operand.vmem [shape: f32[1,32], index: 5, kind: input, shape index: {}]
  %s6 = inlined_call_operand.<no memory space> [shape: f32[1,1], index: 6, kind: input, shape index: {}]
  %s7 = inlined_call_operand.hbm [shape: f32[1,8], index: 7, kind: output, shape index: {}]
  %s8 = sld [smem:[#allocation0]]
  $region46: #{grunn_forward.1} parent=0
    _
  %s10 = ssub.s32 1, %s8
  %s11 = scalar_select 0, %s10, %s8
  %v12 = vstv %s6
  %13 = vst [vmem:[#allocation3] sm:$0x1] %v12
  $region1: #{grunn_forward.1} parent=0
    #allocation4 [shape = 'u8[4096]{0}', space=vmem, size = 0x1000, scoped, tag = 'input window, operand 0, single buffered']
    #allocation5 [shape = 's32[1]{0}', space=sflag, size = 0x4, scoped, tag = 'scoped memory for grunn_forward.1']
    #allocation6 [shape = 's32[1]{0}', space=sflag, size = 0x4, scoped, tag = 'scoped memory for grunn_forward.1']
    #allocation7 [shape = 'u8[16384]{0}', space=vmem, size = 0x4000, scoped, tag = 'input window, operand 2, single buffered']
    #allocation8 [shape = 's32[1]{0}', space=sflag, size = 0x4, scoped, tag = 'scoped memory for grunn_forward.1']
    #allocation9 [shape = 'u8[512]{0}', space=vmem, size = 0x400, scoped, tag = 'output window, operand 0, single buffered']
    %14 = vsyncpa [#allocation5], 0
    %15 = vsyncpa [#allocation8], 0
    %16 = vsyncpa [#allocation6], 0
    // Predicated region
    $region2: #{grunn_forward.1} parent=1 // pred_check
      _
    $region3: #{grunn_forward.1} parent=1 // pred_check_branch
      %18 = sbr.rel (0) target = $region5
    $region4: #{grunn_forward.1} parent=1 // pred_region
      %s20 = ssub.s32 128, 128
      %21 = vsyncadd [#allocation5], %s20
      %s23 = sshll.u32 [#allocation4], 4
      %s24 = int_to_ptr.vmem [resolvable:$true] %s23
      %26 = dma.hbm_to_vmem [thread:$0]  %s0, 128, %s24, [#allocation5]
    $region5: #{grunn_forward.1} parent=1 // pred_fallthru
      _
    // Predicated region
    $region6: #{grunn_forward.1} parent=1 // pred_check
      _
    $region7: #{grunn_forward.1} parent=1 // pred_check_branch
      %28 = sbr.rel (0) target = $region9
    $region8: #{grunn_forward.1} parent=1 // pred_region
      _
    $region9: #{grunn_forward.1} parent=1 // pred_fallthru
      _
    // Predicated region
    $region10: #{grunn_forward.1} parent=1 // pred_check
      _
    $region11: #{grunn_forward.1} parent=1 // pred_check_branch
      %30 = sbr.rel (0) target = $region13
    $region12: #{grunn_forward.1} parent=1 // pred_region
      %s32 = ssub.s32 512, 512
      %33 = vsyncadd [#allocation8], %s32
      %s34 = sshll.u32 [#allocation7], 4
      %s35 = int_to_ptr.vmem [resolvable:$true] %s34
      %40 = dma.hbm_to_vmem [thread:$0]  %s2, 512, %s35, [#allocation8], 128, 128, 8
    $region13: #{grunn_forward.1} parent=1 // pred_fallthru
      _
    // Predicated region
    $region14: #{grunn_forward.1} parent=1 // pred_check
      _
    $region15: #{grunn_forward.1} parent=1 // pred_check_branch
      %42 = sbr.rel (0) target = $region17
    $region16: #{grunn_forward.1} parent=1 // pred_region
      _
    $region17: #{grunn_forward.1} parent=1 // pred_fallthru
      _
    // Predicated region
    $region18: #{grunn_forward.1} parent=1 // pred_check
      _
    $region19: #{grunn_forward.1} parent=1 // pred_check_branch
      %44 = sbr.rel (0) target = $region21
    $region20: #{grunn_forward.1} parent=1 // pred_region
      _
    $region21: #{grunn_forward.1} parent=1 // pred_fallthru
      _
    // Predicated region
    $region22: #{grunn_forward.1} parent=1 // pred_check
      _
    $region23: #{grunn_forward.1} parent=1 // pred_check_branch
      %46 = sbr.rel (0) target = $region25
    $region24: #{grunn_forward.1} parent=1 // pred_region
      _
    $region25: #{grunn_forward.1} parent=1 // pred_fallthru
      _
    // Predicated region
    $region26: #{grunn_forward.1} parent=1 // pred_check
      _
    $region27: #{grunn_forward.1} parent=1 // pred_check_branch
      %48 = sbr.rel (0) target = $region29
    $region28: #{grunn_forward.1} parent=1 // pred_region
      _
    $region29: #{grunn_forward.1} parent=1 // pred_fallthru
      _
    // Predicated region
    $region30: #{grunn_forward.1} parent=1 // pred_check
      _
    $region31: #{grunn_forward.1} parent=1 // pred_check_branch
      %50 = sbr.rel (0) target = $region33
    $region32: #{grunn_forward.1} parent=1 // pred_region
      %51 = dma.done [#allocation5], 128
    $region33: #{grunn_forward.1} parent=1 // pred_fallthru
      _
    // Predicated region
    $region34: #{grunn_forward.1} parent=1 // pred_check
      _
    $region35: #{grunn_forward.1} parent=1 // pred_check_branch
      %53 = sbr.rel (0) target = $region37
    $region36: #{grunn_forward.1} parent=1 // pred_region
      %54 = dma.done [#allocation8], 512
    $region37: #{grunn_forward.1} parent=1 // pred_fallthru
      _
    %v55 = vld [vmem:[#allocation7] sm:$0xff]
    %v56 = vld [vmem:[#allocation7 + $0x8] sm:$0xff]
    %v57 = vld [vmem:[#allocation7 + $0x10] sm:$0xff]
    %v58 = vld [vmem:[#allocation7 + $0x18] sm:$0xff]
    %v59 = vld [vmem:[%s4] sm:$0x1]
    %v60 = vld [vmem:[#allocation4] sm:$0xff]
    %v61 = vld [vmem:[%s1] sm:$0x1]
    %63 = vset.pattern.permute.xlu0 0
    %64 = vperm.xlu0 %63, %v60
    %v65 = vpop.permute.xlu0 %64
    %v68 = vlaneseq
    %v69 = vshrl.u32 %v68, 7
    %v70 = vsub.s32 0, %v69
    %v71 = vrot.slane %v61, %v70
    %v73 = vmul.f32 %v65, %v71
    %v74 = vld [vmem:[%s3] sm:$0x1]
    %v76 = vlaneseq
    %v77 = vshrl.u32 %v76, 7
    %v78 = vsub.s32 0, %v77
    %v79 = vrot.slane %v74, %v78
    %v81 = vadd.f32 %v73, %v79
    %vm82 = vcmask 261120
    %v84 = vsel %vm82, 0.0, 0
    %86 = vmatprep.subr.mxu0 0.0
    %87 = vmatpush1.msra.mxu0 %v55
    %88 = vmatprep.subr.mxu0 0.0
    %89 = vmatpush1.msra.mxu0 %v56
    %90 = vmatprep.subr.mxu0 0.0
    %91 = vmatpush1.msra.mxu0 %v57
    %92 = vmatprep.subr.mxu0 0.0
    %93 = vmatpush1.msra.mxu0 %v58
    %94 = vmatprep.subr.mxu0 0.0
    %95 = vmatpush1.msra.mxu0 0.0
    %96 = vmatprep.subr.mxu0 0.0
    %97 = vmatpush1.msra.mxu0 0.0
    %98 = vmatprep.subr.mxu0 0.0
    %99 = vmatpush1.msra.mxu0 0.0
    %100 = vmatprep.subr.mxu0 0.0
    %101 = vmatpush1.msra.mxu0 0.0
    %102 = vmatprep.subr.mxu0 0.0
    %103 = vmatpush1.msra.mxu0 0.0
    %104 = vmatprep.subr.mxu0 0.0
    %105 = vmatpush1.msra.mxu0 0.0
    %106 = vmatprep.subr.mxu0 0.0
    %107 = vmatpush1.msra.mxu0 0.0
    %108 = vmatprep.subr.mxu0 0.0
    %109 = vmatpush1.msra.mxu0 0.0
    %110 = vmatprep.subr.mxu0 0.0
    %111 = vmatpush1.msra.mxu0 0.0
    %112 = vmatprep.subr.mxu0 0.0
    %113 = vmatpush1.msra.mxu0 0.0
    %114 = vmatprep.subr.mxu0 0.0
    %115 = vmatpush1.msra.mxu0 0.0
    %116 = vmatprep.subr.mxu0 0.0
    %117 = vmatpush1.msra.mxu0 0.0
    %118 = vmatprep.subr.mxu0 0.0
    %119 = vmatpush1.msra.mxu0 0.0
    %120 = vmatprep.subr.mxu0 0.0
    %121 = vmatpush1.msra.mxu0 0.0
    %122 = vmatprep.subr.mxu0 0.0
    %123 = vmatpush1.msra.mxu0 0.0
    %124 = vmatprep.subr.mxu0 0.0
    %125 = vmatpush1.msra.mxu0 0.0
    %126 = vmatprep.subr.mxu0 0.0
    %127 = vmatpush1.msra.mxu0 0.0
    %128 = vmatprep.subr.mxu0 0.0
    %129 = vmatpush1.msra.mxu0 0.0
    %130 = vmatprep.subr.mxu0 0.0
    %131 = vmatpush1.msra.mxu0 0.0
    %132 = vmatprep.subr.mxu0 0.0
    %133 = vmatpush1.msra.mxu0 0.0
    %134 = vmatprep.subr.mxu0 0.0
    %135 = vmatpush1.msra.mxu0 0.0
    %136 = vmatprep.subr.mxu0 0.0
    %137 = vmatpush1.msra.mxu0 0.0
    %138 = vmatprep.subr.mxu0 0.0
    %139 = vmatpush1.msra.mxu0 0.0
    %140 = vmatprep.subr.mxu0 0.0
    %141 = vmatpush1.msra.mxu0 0.0
    %142 = vmatprep.subr.mxu0 0.0
    %143 = vmatpush1.msra.mxu0 0.0
    %144 = vmatprep.subr.mxu0 0.0
    %145 = vmatpush1.msra.mxu0 0.0
    %146 = vmatprep.subr.mxu0 0.0
    %147 = vmatpush1.msra.mxu0 0.0
    %148 = vmatprep.subr.mxu0 0.0
    %149 = vmatpush1.msra.mxu0 0.0
    %150 = vmatprep.mubr.f32.mxu0 0.0
    %151 = vmatmul.mubr.f32.gmra.mrb[0].mxu0 %v84
    %v152 = vpop.f32.mrb[0].mxu0
    %v153 = vadd.f32 0.0, %v152
    %v154 = vpop.f32.mrb[0].mxu0
    %155 = vdwg.mxu0
    %v156 = vadd.f32 %v81, %v153
    %v157 = vxor.u32 %v156, 2147483648
    %v158 = vmul.f32 %v157, 1.442695
    %v159 = vpow.pop %v158
    %v160 = vadd.f32 %v159, 1.0
    %v161 = vrcp.pop %v160
    %v162 = vmul.f32 1.0, %v161
    %v164 = vlaneseq
    %v165 = vshrl.u32 %v164, 7
    %v166 = vsub.s32 0, %v165
    %v167 = vrot.slane %v59, %v166
    %168 = vrot.lane.b32.xlu0 %v167, 64
    %v169 = vpop.permute.xlu0 %168
    %v171 = vadd.f32 %v153, %v169
    %173 = vrot.lane.b32.xlu0 %v171, 64
    %v174 = vpop.permute.xlu0 %173
    %v176 = vmul.f32 %v162, %v174
    %178 = vrot.lane.b32.xlu0 %v176, 64
    %v179 = vpop.permute.xlu0 %178
    %v181 = vadd.f32 %v81, %v179
    %v182 = vtanh.pop %v181
    %v183 = vsub.f32 1.0, %v162
    %185 = vrot.lane.b32.xlu0 %v182, 96
    %v186 = vpop.permute.xlu0 %185
    %v188 = vmul.f32 %v183, %v186
    %v189 = vmul.f32 %v162, 0.0
    %v190 = vadd.f32 %v188, %v189
    %192 = vrot.lane.b32.xlu0 %v190, 96
    %v193 = vpop.permute.xlu0 %192
    %vm195 = vcmask 253952
    %196 = vst.msk [vmem:[#allocation2] sm:$0x1] %vm195, %v193
    %v197 = vsel %vm82, %v193, 0
    %199 = vmatprep.subr.mxu0 0.0
    %200 = vmatpush1.msra.mxu0 %v55
    %201 = vmatprep.subr.mxu0 0.0
    %202 = vmatpush1.msra.mxu0 %v56
    %203 = vmatprep.subr.mxu0 0.0
    %204 = vmatpush1.msra.mxu0 %v57
    %205 = vmatprep.subr.mxu0 0.0
    %206 = vmatpush1.msra.mxu0 %v58
    %207 = vmatprep.subr.mxu0 0.0
    %208 = vmatpush1.msra.mxu0 0.0
    %209 = vmatprep.subr.mxu0 0.0
    %210 = vmatpush1.msra.mxu0 0.0
    %211 = vmatprep.subr.mxu0 0.0
    %212 = vmatpush1.msra.mxu0 0.0
    %213 = vmatprep.subr.mxu0 0.0
    %214 = vmatpush1.msra.mxu0 0.0
    %215 = vmatprep.subr.mxu0 0.0
    %216 = vmatpush1.msra.mxu0 0.0
    %217 = vmatprep.subr.mxu0 0.0
    %218 = vmatpush1.msra.mxu0 0.0
    %219 = vmatprep.subr.mxu0 0.0
    %220 = vmatpush1.msra.mxu0 0.0
    %221 = vmatprep.subr.mxu0 0.0
    %222 = vmatpush1.msra.mxu0 0.0
    %223 = vmatprep.subr.mxu0 0.0
    %224 = vmatpush1.msra.mxu0 0.0
    %225 = vmatprep.subr.mxu0 0.0
    %226 = vmatpush1.msra.mxu0 0.0
    %227 = vmatprep.subr.mxu0 0.0
    %228 = vmatpush1.msra.mxu0 0.0
    %229 = vmatprep.subr.mxu0 0.0
    %230 = vmatpush1.msra.mxu0 0.0
    %231 = vmatprep.subr.mxu0 0.0
    %232 = vmatpush1.msra.mxu0 0.0
    %233 = vmatprep.subr.mxu0 0.0
    %234 = vmatpush1.msra.mxu0 0.0
    %235 = vmatprep.subr.mxu0 0.0
    %236 = vmatpush1.msra.mxu0 0.0
    %237 = vmatprep.subr.mxu0 0.0
    %238 = vmatpush1.msra.mxu0 0.0
    %239 = vmatprep.subr.mxu0 0.0
    %240 = vmatpush1.msra.mxu0 0.0
    %241 = vmatprep.subr.mxu0 0.0
    %242 = vmatpush1.msra.mxu0 0.0
    %243 = vmatprep.subr.mxu0 0.0
    %244 = vmatpush1.msra.mxu0 0.0
    %245 = vmatprep.subr.mxu0 0.0
    %246 = vmatpush1.msra.mxu0 0.0
    %247 = vmatprep.subr.mxu0 0.0
    %248 = vmatpush1.msra.mxu0 0.0
    %249 = vmatprep.subr.mxu0 0.0
    %250 = vmatpush1.msra.mxu0 0.0
    %251 = vmatprep.subr.mxu0 0.0
    %252 = vmatpush1.msra.mxu0 0.0
    %253 = vmatprep.subr.mxu0 0.0
    %254 = vmatpush1.msra.mxu0 0.0
    %255 = vmatprep.subr.mxu0 0.0
    %256 = vmatpush1.msra.mxu0 0.0
    %257 = vmatprep.subr.mxu0 0.0
    %258 = vmatpush1.msra.mxu0 0.0
    %259 = vmatprep.subr.mxu0 0.0
    %260 = vmatpush1.msra.mxu0 0.0
    %261 = vmatprep.subr.mxu0 0.0
    %262 = vmatpush1.msra.mxu0 0.0
    %263 = vmatprep.mubr.f32.mxu0 0.0
    %264 = vmatmul.mubr.f32.gmra.mrb[0].mxu0 %v197
    %v265 = vpop.f32.mrb[0].mxu0
    %v266 = vadd.f32 0.0, %v265
    %v267 = vpop.f32.mrb[0].mxu0
    %268 = vdwg.mxu0
    %v270 = vrot.slane %v266, 7
    %v272 = vadd.f32 %v81, %v270
    %v273 = vxor.u32 %v272, 2147483648
    %v274 = vmul.f32 %v273, 1.442695
    %v275 = vpow.pop %v274
    %v276 = vadd.f32 %v275, 1.0
    %v277 = vrcp.pop %v276
    %v278 = vmul.f32 1.0, %v277
    %v279 = vadd.f32 %v266, %v169
    %v281 = vrot.slane %v279, 7
    %282 = vrot.lane.b32.xlu0 %v281, 64
    %v283 = vpop.permute.xlu0 %282
    %v285 = vmul.f32 %v278, %v283
    %287 = vrot.lane.b32.xlu0 %v285, 64
    %v288 = vpop.permute.xlu0 %287
    %v290 = vadd.f32 %v81, %v288
    %v291 = vtanh.pop %v290
    %v292 = vsub.f32 1.0, %v278
    %294 = vrot.lane.b32.xlu0 %v291, 96
    %v295 = vpop.permute.xlu0 %294
    %v297 = vmul.f32 %v292, %v295
    %v298 = vrot.slane %v190, 7
    %v300 = vmul.f32 %v278, %v298
    %v301 = vadd.f32 %v297, %v300
    %303 = vrot.lane.b32.xlu0 %v301, 96
    %v304 = vpop.permute.xlu0 %303
    %vm306 = vcmask 254977
    %307 = vst.msk [vmem:[#allocation2] sm:$0x2] %vm306, %v304
    %v308 = vrot.slane %v301, 1
    %309 = vrot.lane.b32.xlu0 %v308, 96
    %v310 = vpop.permute.xlu0 %309
    %v311 = vsel %vm82, %v310, 0
    %313 = vmatprep.subr.mxu0 0.0
    %314 = vmatpush1.msra.mxu0 %v55
    %315 = vmatprep.subr.mxu0 0.0
    %316 = vmatpush1.msra.mxu0 %v56
    %317 = vmatprep.subr.mxu0 0.0
    %318 = vmatpush1.msra.mxu0 %v57
    %319 = vmatprep.subr.mxu0 0.0
    %320 = vmatpush1.msra.mxu0 %v58
    %321 = vmatprep.subr.mxu0 0.0
    %322 = vmatpush1.msra.mxu0 0.0
    %323 = vmatprep.subr.mxu0 0.0
    %324 = vmatpush1.msra.mxu0 0.0
    %325 = vmatprep.subr.mxu0 0.0
    %326 = vmatpush1.msra.mxu0 0.0
    %327 = vmatprep.subr.mxu0 0.0
    %328 = vmatpush1.msra.mxu0 0.0
    %329 = vmatprep.subr.mxu0 0.0
    %330 = vmatpush1.msra.mxu0 0.0
    %331 = vmatprep.subr.mxu0 0.0
    %332 = vmatpush1.msra.mxu0 0.0
    %333 = vmatprep.subr.mxu0 0.0
    %334 = vmatpush1.msra.mxu0 0.0
    %335 = vmatprep.subr.mxu0 0.0
    %336 = vmatpush1.msra.mxu0 0.0
    %337 = vmatprep.subr.mxu0 0.0
    %338 = vmatpush1.msra.mxu0 0.0
    %339 = vmatprep.subr.mxu0 0.0
    %340 = vmatpush1.msra.mxu0 0.0
    %341 = vmatprep.subr.mxu0 0.0
    %342 = vmatpush1.msra.mxu0 0.0
    %343 = vmatprep.subr.mxu0 0.0
    %344 = vmatpush1.msra.mxu0 0.0
    %345 = vmatprep.subr.mxu0 0.0
    %346 = vmatpush1.msra.mxu0 0.0
    %347 = vmatprep.subr.mxu0 0.0
    %348 = vmatpush1.msra.mxu0 0.0
    %349 = vmatprep.subr.mxu0 0.0
    %350 = vmatpush1.msra.mxu0 0.0
    %351 = vmatprep.subr.mxu0 0.0
    %352 = vmatpush1.msra.mxu0 0.0
    %353 = vmatprep.subr.mxu0 0.0
    %354 = vmatpush1.msra.mxu0 0.0
    %355 = vmatprep.subr.mxu0 0.0
    %356 = vmatpush1.msra.mxu0 0.0
    %357 = vmatprep.subr.mxu0 0.0
    %358 = vmatpush1.msra.mxu0 0.0
    %359 = vmatprep.subr.mxu0 0.0
    %360 = vmatpush1.msra.mxu0 0.0
    %361 = vmatprep.subr.mxu0 0.0
    %362 = vmatpush1.msra.mxu0 0.0
    %363 = vmatprep.subr.mxu0 0.0
    %364 = vmatpush1.msra.mxu0 0.0
    %365 = vmatprep.subr.mxu0 0.0
    %366 = vmatpush1.msra.mxu0 0.0
    %367 = vmatprep.subr.mxu0 0.0
    %368 = vmatpush1.msra.mxu0 0.0
    %369 = vmatprep.subr.mxu0 0.0
    %370 = vmatpush1.msra.mxu0 0.0
    %371 = vmatprep.subr.mxu0 0.0
    %372 = vmatpush1.msra.mxu0 0.0
    %373 = vmatprep.subr.mxu0 0.0
    %374 = vmatpush1.msra.mxu0 0.0
    %375 = vmatprep.subr.mxu0 0.0
    %376 = vmatpush1.msra.mxu0 0.0
    %377 = vmatprep.mubr.f32.mxu0 0.0
    %378 = vmatmul.mubr.f32.gmra.mrb[0].mxu0 %v311
    %v379 = vpop.f32.mrb[0].mxu0
    %v380 = vadd.f32 0.0, %v379
    %v381 = vpop.f32.mrb[0].mxu0
    %382 = vdwg.mxu0
    %v384 = vrot.slane %v380, 6
    %v386 = vadd.f32 %v81, %v384
    %v387 = vxor.u32 %v386, 2147483648
    %v388 = vmul.f32 %v387, 1.442695
    %v389 = vpow.pop %v388
    %v390 = vadd.f32 %v389, 1.0
    %v391 = vrcp.pop %v390
    %v392 = vmul.f32 1.0, %v391
    %v393 = vadd.f32 %v380, %v169
    %v395 = vrot.slane %v393, 6
    %396 = vrot.lane.b32.xlu0 %v395, 64
    %v397 = vpop.permute.xlu0 %396
    %v399 = vmul.f32 %v392, %v397
    %401 = vrot.lane.b32.xlu0 %v399, 64
    %v402 = vpop.permute.xlu0 %401
    %v404 = vadd.f32 %v81, %v402
    %v405 = vtanh.pop %v404
    %v406 = vsub.f32 1.0, %v392
    %408 = vrot.lane.b32.xlu0 %v405, 96
    %v409 = vpop.permute.xlu0 %408
    %v411 = vmul.f32 %v406, %v409
    %v412 = vrot.slane %v301, 7
    %v414 = vmul.f32 %v392, %v412
    %v415 = vadd.f32 %v411, %v414
    %417 = vrot.lane.b32.xlu0 %v415, 96
    %v418 = vpop.permute.xlu0 %417
    %vm420 = vcmask 256002
    %421 = vst.msk [vmem:[#allocation2] sm:$0x4] %vm420, %v418
    %v422 = vrot.slane %v415, 2
    %423 = vrot.lane.b32.xlu0 %v422, 96
    %v424 = vpop.permute.xlu0 %423
    %v425 = vsel %vm82, %v424, 0
    %427 = vmatprep.subr.mxu0 0.0
    %428 = vmatpush1.msra.mxu0 %v55
    %429 = vmatprep.subr.mxu0 0.0
    %430 = vmatpush1.msra.mxu0 %v56
    %431 = vmatprep.subr.mxu0 0.0
    %432 = vmatpush1.msra.mxu0 %v57
    %433 = vmatprep.subr.mxu0 0.0
    %434 = vmatpush1.msra.mxu0 %v58
    %435 = vmatprep.subr.mxu0 0.0
    %436 = vmatpush1.msra.mxu0 0.0
    %437 = vmatprep.subr.mxu0 0.0
    %438 = vmatpush1.msra.mxu0 0.0
    %439 = vmatprep.subr.mxu0 0.0
    %440 = vmatpush1.msra.mxu0 0.0
    %441 = vmatprep.subr.mxu0 0.0
    %442 = vmatpush1.msra.mxu0 0.0
    %443 = vmatprep.subr.mxu0 0.0
    %444 = vmatpush1.msra.mxu0 0.0
    %445 = vmatprep.subr.mxu0 0.0
    %446 = vmatpush1.msra.mxu0 0.0
    %447 = vmatprep.subr.mxu0 0.0
    %448 = vmatpush1.msra.mxu0 0.0
    %449 = vmatprep.subr.mxu0 0.0
    %450 = vmatpush1.msra.mxu0 0.0
    %451 = vmatprep.subr.mxu0 0.0
    %452 = vmatpush1.msra.mxu0 0.0
    %453 = vmatprep.subr.mxu0 0.0
    %454 = vmatpush1.msra.mxu0 0.0
    %455 = vmatprep.subr.mxu0 0.0
    %456 = vmatpush1.msra.mxu0 0.0
    %457 = vmatprep.subr.mxu0 0.0
    %458 = vmatpush1.msra.mxu0 0.0
    %459 = vmatprep.subr.mxu0 0.0
    %460 = vmatpush1.msra.mxu0 0.0
    %461 = vmatprep.subr.mxu0 0.0
    %462 = vmatpush1.msra.mxu0 0.0
    %463 = vmatprep.subr.mxu0 0.0
    %464 = vmatpush1.msra.mxu0 0.0
    %465 = vmatprep.subr.mxu0 0.0
    %466 = vmatpush1.msra.mxu0 0.0
    %467 = vmatprep.subr.mxu0 0.0
    %468 = vmatpush1.msra.mxu0 0.0
    %469 = vmatprep.subr.mxu0 0.0
    %470 = vmatpush1.msra.mxu0 0.0
    %471 = vmatprep.subr.mxu0 0.0
    %472 = vmatpush1.msra.mxu0 0.0
    %473 = vmatprep.subr.mxu0 0.0
    %474 = vmatpush1.msra.mxu0 0.0
    %475 = vmatprep.subr.mxu0 0.0
    %476 = vmatpush1.msra.mxu0 0.0
    %477 = vmatprep.subr.mxu0 0.0
    %478 = vmatpush1.msra.mxu0 0.0
    %479 = vmatprep.subr.mxu0 0.0
    %480 = vmatpush1.msra.mxu0 0.0
    %481 = vmatprep.subr.mxu0 0.0
    %482 = vmatpush1.msra.mxu0 0.0
    %483 = vmatprep.subr.mxu0 0.0
    %484 = vmatpush1.msra.mxu0 0.0
    %485 = vmatprep.subr.mxu0 0.0
    %486 = vmatpush1.msra.mxu0 0.0
    %487 = vmatprep.subr.mxu0 0.0
    %488 = vmatpush1.msra.mxu0 0.0
    %489 = vmatprep.subr.mxu0 0.0
    %490 = vmatpush1.msra.mxu0 0.0
    %491 = vmatprep.mubr.f32.mxu0 0.0
    %492 = vmatmul.mubr.f32.gmra.mrb[0].mxu0 %v425
    %v493 = vpop.f32.mrb[0].mxu0
    %v494 = vadd.f32 0.0, %v493
    %v495 = vpop.f32.mrb[0].mxu0
    %496 = vdwg.mxu0
    %v498 = vrot.slane %v494, 5
    %v500 = vadd.f32 %v81, %v498
    %v501 = vxor.u32 %v500, 2147483648
    %v502 = vmul.f32 %v501, 1.442695
    %v503 = vpow.pop %v502
    %v504 = vadd.f32 %v503, 1.0
    %v505 = vrcp.pop %v504
    %v506 = vmul.f32 1.0, %v505
    %v507 = vadd.f32 %v494, %v169
    %v509 = vrot.slane %v507, 5
    %510 = vrot.lane.b32.xlu0 %v509, 64
    %v511 = vpop.permute.xlu0 %510
    %v513 = vmul.f32 %v506, %v511
    %515 = vrot.lane.b32.xlu0 %v513, 64
    %v516 = vpop.permute.xlu0 %515
    %v518 = vadd.f32 %v81, %v516
    %v519 = vtanh.pop %v518
    %v520 = vsub.f32 1.0, %v506
    %522 = vrot.lane.b32.xlu0 %v519, 96
    %v523 = vpop.permute.xlu0 %522
    %v525 = vmul.f32 %v520, %v523
    %v526 = vrot.slane %v415, 7
    %v528 = vmul.f32 %v506, %v526
    %v529 = vadd.f32 %v525, %v528
    %531 = vrot.lane.b32.xlu0 %v529, 96
    %v532 = vpop.permute.xlu0 %531
    %vm534 = vcmask 257027
    %535 = vst.msk [vmem:[#allocation2] sm:$0x8] %vm534, %v532
    %v536 = vrot.slane %v529, 3
    %537 = vrot.lane.b32.xlu0 %v536, 96
    %v538 = vpop.permute.xlu0 %537
    %v539 = vsel %vm82, %v538, 0
    %541 = vmatprep.subr.mxu0 0.0
    %542 = vmatpush1.msra.mxu0 %v55
    %543 = vmatprep.subr.mxu0 0.0
    %544 = vmatpush1.msra.mxu0 %v56
    %545 = vmatprep.subr.mxu0 0.0
    %546 = vmatpush1.msra.mxu0 %v57
    %547 = vmatprep.subr.mxu0 0.0
    %548 = vmatpush1.msra.mxu0 %v58
    %549 = vmatprep.subr.mxu0 0.0
    %550 = vmatpush1.msra.mxu0 0.0
    %551 = vmatprep.subr.mxu0 0.0
    %552 = vmatpush1.msra.mxu0 0.0
    %553 = vmatprep.subr.mxu0 0.0
    %554 = vmatpush1.msra.mxu0 0.0
    %555 = vmatprep.subr.mxu0 0.0
    %556 = vmatpush1.msra.mxu0 0.0
    %557 = vmatprep.subr.mxu0 0.0
    %558 = vmatpush1.msra.mxu0 0.0
    %559 = vmatprep.subr.mxu0 0.0
    %560 = vmatpush1.msra.mxu0 0.0
    %561 = vmatprep.subr.mxu0 0.0
    %562 = vmatpush1.msra.mxu0 0.0
    %563 = vmatprep.subr.mxu0 0.0
    %564 = vmatpush1.msra.mxu0 0.0
    %565 = vmatprep.subr.mxu0 0.0
    %566 = vmatpush1.msra.mxu0 0.0
    %567 = vmatprep.subr.mxu0 0.0
    %568 = vmatpush1.msra.mxu0 0.0
    %569 = vmatprep.subr.mxu0 0.0
    %570 = vmatpush1.msra.mxu0 0.0
    %571 = vmatprep.subr.mxu0 0.0
    %572 = vmatpush1.msra.mxu0 0.0
    %573 = vmatprep.subr.mxu0 0.0
    %574 = vmatpush1.msra.mxu0 0.0
    %575 = vmatprep.subr.mxu0 0.0
    %576 = vmatpush1.msra.mxu0 0.0
    %577 = vmatprep.subr.mxu0 0.0
    %578 = vmatpush1.msra.mxu0 0.0
    %579 = vmatprep.subr.mxu0 0.0
    %580 = vmatpush1.msra.mxu0 0.0
    %581 = vmatprep.subr.mxu0 0.0
    %582 = vmatpush1.msra.mxu0 0.0
    %583 = vmatprep.subr.mxu0 0.0
    %584 = vmatpush1.msra.mxu0 0.0
    %585 = vmatprep.subr.mxu0 0.0
    %586 = vmatpush1.msra.mxu0 0.0
    %587 = vmatprep.subr.mxu0 0.0
    %588 = vmatpush1.msra.mxu0 0.0
    %589 = vmatprep.subr.mxu0 0.0
    %590 = vmatpush1.msra.mxu0 0.0
    %591 = vmatprep.subr.mxu0 0.0
    %592 = vmatpush1.msra.mxu0 0.0
    %593 = vmatprep.subr.mxu0 0.0
    %594 = vmatpush1.msra.mxu0 0.0
    %595 = vmatprep.subr.mxu0 0.0
    %596 = vmatpush1.msra.mxu0 0.0
    %597 = vmatprep.subr.mxu0 0.0
    %598 = vmatpush1.msra.mxu0 0.0
    %599 = vmatprep.subr.mxu0 0.0
    %600 = vmatpush1.msra.mxu0 0.0
    %601 = vmatprep.subr.mxu0 0.0
    %602 = vmatpush1.msra.mxu0 0.0
    %603 = vmatprep.subr.mxu0 0.0
    %604 = vmatpush1.msra.mxu0 0.0
    %605 = vmatprep.mubr.f32.mxu0 0.0
    %606 = vmatmul.mubr.f32.gmra.mrb[0].mxu0 %v539
    %v607 = vpop.f32.mrb[0].mxu0
    %v608 = vadd.f32 0.0, %v607
    %v609 = vpop.f32.mrb[0].mxu0
    %610 = vdwg.mxu0
    %v612 = vrot.slane %v608, 4
    %v614 = vadd.f32 %v81, %v612
    %v615 = vxor.u32 %v614, 2147483648
    %v616 = vmul.f32 %v615, 1.442695
    %v617 = vpow.pop %v616
    %v618 = vadd.f32 %v617, 1.0
    %v619 = vrcp.pop %v618
    %v620 = vmul.f32 1.0, %v619
    %v621 = vadd.f32 %v608, %v169
    %v623 = vrot.slane %v621, 4
    %624 = vrot.lane.b32.xlu0 %v623, 64
    %v625 = vpop.permute.xlu0 %624
    %v627 = vmul.f32 %v620, %v625
    %629 = vrot.lane.b32.xlu0 %v627, 64
    %v630 = vpop.permute.xlu0 %629
    %v632 = vadd.f32 %v81, %v630
    %v633 = vtanh.pop %v632
    %v634 = vsub.f32 1.0, %v620
    %636 = vrot.lane.b32.xlu0 %v633, 96
    %v637 = vpop.permute.xlu0 %636
    %v639 = vmul.f32 %v634, %v637
    %v640 = vrot.slane %v529, 7
    %v642 = vmul.f32 %v620, %v640
    %v643 = vadd.f32 %v639, %v642
    %645 = vrot.lane.b32.xlu0 %v643, 96
    %v646 = vpop.permute.xlu0 %645
    %vm648 = vcmask 258052
    %649 = vst.msk [vmem:[#allocation2] sm:$0x10] %vm648, %v646
    %v650 = vrot.slane %v643, 4
    %651 = vrot.lane.b32.xlu0 %v650, 96
    %v652 = vpop.permute.xlu0 %651
    %v653 = vsel %vm82, %v652, 0
    %655 = vmatprep.subr.mxu0 0.0
    %656 = vmatpush1.msra.mxu0 %v55
    %657 = vmatprep.subr.mxu0 0.0
    %658 = vmatpush1.msra.mxu0 %v56
    %659 = vmatprep.subr.mxu0 0.0
    %660 = vmatpush1.msra.mxu0 %v57
    %661 = vmatprep.subr.mxu0 0.0
    %662 = vmatpush1.msra.mxu0 %v58
    %663 = vmatprep.subr.mxu0 0.0
    %664 = vmatpush1.msra.mxu0 0.0
    %665 = vmatprep.subr.mxu0 0.0
    %666 = vmatpush1.msra.mxu0 0.0
    %667 = vmatprep.subr.mxu0 0.0
    %668 = vmatpush1.msra.mxu0 0.0
    %669 = vmatprep.subr.mxu0 0.0
    %670 = vmatpush1.msra.mxu0 0.0
    %671 = vmatprep.subr.mxu0 0.0
    %672 = vmatpush1.msra.mxu0 0.0
    %673 = vmatprep.subr.mxu0 0.0
    %674 = vmatpush1.msra.mxu0 0.0
    %675 = vmatprep.subr.mxu0 0.0
    %676 = vmatpush1.msra.mxu0 0.0
    %677 = vmatprep.subr.mxu0 0.0
    %678 = vmatpush1.msra.mxu0 0.0
    %679 = vmatprep.subr.mxu0 0.0
    %680 = vmatpush1.msra.mxu0 0.0
    %681 = vmatprep.subr.mxu0 0.0
    %682 = vmatpush1.msra.mxu0 0.0
    %683 = vmatprep.subr.mxu0 0.0
    %684 = vmatpush1.msra.mxu0 0.0
    %685 = vmatprep.subr.mxu0 0.0
    %686 = vmatpush1.msra.mxu0 0.0
    %687 = vmatprep.subr.mxu0 0.0
    %688 = vmatpush1.msra.mxu0 0.0
    %689 = vmatprep.subr.mxu0 0.0
    %690 = vmatpush1.msra.mxu0 0.0
    %691 = vmatprep.subr.mxu0 0.0
    %692 = vmatpush1.msra.mxu0 0.0
    %693 = vmatprep.subr.mxu0 0.0
    %694 = vmatpush1.msra.mxu0 0.0
    %695 = vmatprep.subr.mxu0 0.0
    %696 = vmatpush1.msra.mxu0 0.0
    %697 = vmatprep.subr.mxu0 0.0
    %698 = vmatpush1.msra.mxu0 0.0
    %699 = vmatprep.subr.mxu0 0.0
    %700 = vmatpush1.msra.mxu0 0.0
    %701 = vmatprep.subr.mxu0 0.0
    %702 = vmatpush1.msra.mxu0 0.0
    %703 = vmatprep.subr.mxu0 0.0
    %704 = vmatpush1.msra.mxu0 0.0
    %705 = vmatprep.subr.mxu0 0.0
    %706 = vmatpush1.msra.mxu0 0.0
    %707 = vmatprep.subr.mxu0 0.0
    %708 = vmatpush1.msra.mxu0 0.0
    %709 = vmatprep.subr.mxu0 0.0
    %710 = vmatpush1.msra.mxu0 0.0
    %711 = vmatprep.subr.mxu0 0.0
    %712 = vmatpush1.msra.mxu0 0.0
    %713 = vmatprep.subr.mxu0 0.0
    %714 = vmatpush1.msra.mxu0 0.0
    %715 = vmatprep.subr.mxu0 0.0
    %716 = vmatpush1.msra.mxu0 0.0
    %717 = vmatprep.subr.mxu0 0.0
    %718 = vmatpush1.msra.mxu0 0.0
    %719 = vmatprep.mubr.f32.mxu0 0.0
    %720 = vmatmul.mubr.f32.gmra.mrb[0].mxu0 %v653
    %v721 = vpop.f32.mrb[0].mxu0
    %v722 = vadd.f32 0.0, %v721
    %v723 = vpop.f32.mrb[0].mxu0
    %724 = vdwg.mxu0
    %v726 = vrot.slane %v722, 3
    %v728 = vadd.f32 %v81, %v726
    %v729 = vxor.u32 %v728, 2147483648
    %v730 = vmul.f32 %v729, 1.442695
    %v731 = vpow.pop %v730
    %v732 = vadd.f32 %v731, 1.0
    %v733 = vrcp.pop %v732
    %v734 = vmul.f32 1.0, %v733
    %v735 = vadd.f32 %v722, %v169
    %v737 = vrot.slane %v735, 3
    %738 = vrot.lane.b32.xlu0 %v737, 64
    %v739 = vpop.permute.xlu0 %738
    %v741 = vmul.f32 %v734, %v739
    %743 = vrot.lane.b32.xlu0 %v741, 64
    %v744 = vpop.permute.xlu0 %743
    %v746 = vadd.f32 %v81, %v744
    %v747 = vtanh.pop %v746
    %v748 = vsub.f32 1.0, %v734
    %750 = vrot.lane.b32.xlu0 %v747, 96
    %v751 = vpop.permute.xlu0 %750
    %v753 = vmul.f32 %v748, %v751
    %v754 = vrot.slane %v643, 7
    %v756 = vmul.f32 %v734, %v754
    %v757 = vadd.f32 %v753, %v756
    %759 = vrot.lane.b32.xlu0 %v757, 96
    %v760 = vpop.permute.xlu0 %759
    %vm762 = vcmask 259077
    %763 = vst.msk [vmem:[#allocation2] sm:$0x20] %vm762, %v760
    %v764 = vrot.slane %v757, 5
    %765 = vrot.lane.b32.xlu0 %v764, 96
    %v766 = vpop.permute.xlu0 %765
    %v767 = vsel %vm82, %v766, 0
    %769 = vmatprep.subr.mxu0 0.0
    %770 = vmatpush1.msra.mxu0 %v55
    %771 = vmatprep.subr.mxu0 0.0
    %772 = vmatpush1.msra.mxu0 %v56
    %773 = vmatprep.subr.mxu0 0.0
    %774 = vmatpush1.msra.mxu0 %v57
    %775 = vmatprep.subr.mxu0 0.0
    %776 = vmatpush1.msra.mxu0 %v58
    %777 = vmatprep.subr.mxu0 0.0
    %778 = vmatpush1.msra.mxu0 0.0
    %779 = vmatprep.subr.mxu0 0.0
    %780 = vmatpush1.msra.mxu0 0.0
    %781 = vmatprep.subr.mxu0 0.0
    %782 = vmatpush1.msra.mxu0 0.0
    %783 = vmatprep.subr.mxu0 0.0
    %784 = vmatpush1.msra.mxu0 0.0
    %785 = vmatprep.subr.mxu0 0.0
    %786 = vmatpush1.msra.mxu0 0.0
    %787 = vmatprep.subr.mxu0 0.0
    %788 = vmatpush1.msra.mxu0 0.0
    %789 = vmatprep.subr.mxu0 0.0
    %790 = vmatpush1.msra.mxu0 0.0
    %791 = vmatprep.subr.mxu0 0.0
    %792 = vmatpush1.msra.mxu0 0.0
    %793 = vmatprep.subr.mxu0 0.0
    %794 = vmatpush1.msra.mxu0 0.0
    %795 = vmatprep.subr.mxu0 0.0
    %796 = vmatpush1.msra.mxu0 0.0
    %797 = vmatprep.subr.mxu0 0.0
    %798 = vmatpush1.msra.mxu0 0.0
    %799 = vmatprep.subr.mxu0 0.0
    %800 = vmatpush1.msra.mxu0 0.0
    %801 = vmatprep.subr.mxu0 0.0
    %802 = vmatpush1.msra.mxu0 0.0
    %803 = vmatprep.subr.mxu0 0.0
    %804 = vmatpush1.msra.mxu0 0.0
    %805 = vmatprep.subr.mxu0 0.0
    %806 = vmatpush1.msra.mxu0 0.0
    %807 = vmatprep.subr.mxu0 0.0
    %808 = vmatpush1.msra.mxu0 0.0
    %809 = vmatprep.subr.mxu0 0.0
    %810 = vmatpush1.msra.mxu0 0.0
    %811 = vmatprep.subr.mxu0 0.0
    %812 = vmatpush1.msra.mxu0 0.0
    %813 = vmatprep.subr.mxu0 0.0
    %814 = vmatpush1.msra.mxu0 0.0
    %815 = vmatprep.subr.mxu0 0.0
    %816 = vmatpush1.msra.mxu0 0.0
    %817 = vmatprep.subr.mxu0 0.0
    %818 = vmatpush1.msra.mxu0 0.0
    %819 = vmatprep.subr.mxu0 0.0
    %820 = vmatpush1.msra.mxu0 0.0
    %821 = vmatprep.subr.mxu0 0.0
    %822 = vmatpush1.msra.mxu0 0.0
    %823 = vmatprep.subr.mxu0 0.0
    %824 = vmatpush1.msra.mxu0 0.0
    %825 = vmatprep.subr.mxu0 0.0
    %826 = vmatpush1.msra.mxu0 0.0
    %827 = vmatprep.subr.mxu0 0.0
    %828 = vmatpush1.msra.mxu0 0.0
    %829 = vmatprep.subr.mxu0 0.0
    %830 = vmatpush1.msra.mxu0 0.0
    %831 = vmatprep.subr.mxu0 0.0
    %832 = vmatpush1.msra.mxu0 0.0
    %833 = vmatprep.mubr.f32.mxu0 0.0
    %834 = vmatmul.mubr.f32.gmra.mrb[0].mxu0 %v767
    %v835 = vpop.f32.mrb[0].mxu0
    %v836 = vadd.f32 0.0, %v835
    %v837 = vpop.f32.mrb[0].mxu0
    %838 = vdwg.mxu0
    %v840 = vrot.slane %v836, 2
    %v842 = vadd.f32 %v81, %v840
    %v843 = vxor.u32 %v842, 2147483648
    %v844 = vmul.f32 %v843, 1.442695
    %v845 = vpow.pop %v844
    %v846 = vadd.f32 %v845, 1.0
    %v847 = vrcp.pop %v846
    %v848 = vmul.f32 1.0, %v847
    %v849 = vadd.f32 %v836, %v169
    %v851 = vrot.slane %v849, 2
    %852 = vrot.lane.b32.xlu0 %v851, 64
    %v853 = vpop.permute.xlu0 %852
    %v855 = vmul.f32 %v848, %v853
    %857 = vrot.lane.b32.xlu0 %v855, 64
    %v858 = vpop.permute.xlu0 %857
    %v860 = vadd.f32 %v81, %v858
    %v861 = vtanh.pop %v860
    %v862 = vsub.f32 1.0, %v848
    %864 = vrot.lane.b32.xlu0 %v861, 96
    %v865 = vpop.permute.xlu0 %864
    %v867 = vmul.f32 %v862, %v865
    %v868 = vrot.slane %v757, 7
    %v870 = vmul.f32 %v848, %v868
    %v871 = vadd.f32 %v867, %v870
    %873 = vrot.lane.b32.xlu0 %v871, 96
    %v874 = vpop.permute.xlu0 %873
    %vm876 = vcmask 260102
    %877 = vst.msk [vmem:[#allocation2] sm:$0x40] %vm876, %v874
    %v878 = vrot.slane %v871, 6
    %879 = vrot.lane.b32.xlu0 %v878, 96
    %v880 = vpop.permute.xlu0 %879
    %v881 = vsel %vm82, %v880, 0
    %883 = vmatprep.subr.mxu0 0.0
    %884 = vmatpush1.msra.mxu0 %v55
    %885 = vmatprep.subr.mxu0 0.0
    %886 = vmatpush1.msra.mxu0 %v56
    %887 = vmatprep.subr.mxu0 0.0
    %888 = vmatpush1.msra.mxu0 %v57
    %889 = vmatprep.subr.mxu0 0.0
    %890 = vmatpush1.msra.mxu0 %v58
    %891 = vmatprep.subr.mxu0 0.0
    %892 = vmatpush1.msra.mxu0 0.0
    %893 = vmatprep.subr.mxu0 0.0
    %894 = vmatpush1.msra.mxu0 0.0
    %895 = vmatprep.subr.mxu0 0.0
    %896 = vmatpush1.msra.mxu0 0.0
    %897 = vmatprep.subr.mxu0 0.0
    %898 = vmatpush1.msra.mxu0 0.0
    %899 = vmatprep.subr.mxu0 0.0
    %900 = vmatpush1.msra.mxu0 0.0
    %901 = vmatprep.subr.mxu0 0.0
    %902 = vmatpush1.msra.mxu0 0.0
    %903 = vmatprep.subr.mxu0 0.0
    %904 = vmatpush1.msra.mxu0 0.0
    %905 = vmatprep.subr.mxu0 0.0
    %906 = vmatpush1.msra.mxu0 0.0
    %907 = vmatprep.subr.mxu0 0.0
    %908 = vmatpush1.msra.mxu0 0.0
    %909 = vmatprep.subr.mxu0 0.0
    %910 = vmatpush1.msra.mxu0 0.0
    %911 = vmatprep.subr.mxu0 0.0
    %912 = vmatpush1.msra.mxu0 0.0
    %913 = vmatprep.subr.mxu0 0.0
    %914 = vmatpush1.msra.mxu0 0.0
    %915 = vmatprep.subr.mxu0 0.0
    %916 = vmatpush1.msra.mxu0 0.0
    %917 = vmatprep.subr.mxu0 0.0
    %918 = vmatpush1.msra.mxu0 0.0
    %919 = vmatprep.subr.mxu0 0.0
    %920 = vmatpush1.msra.mxu0 0.0
    %921 = vmatprep.subr.mxu0 0.0
    %922 = vmatpush1.msra.mxu0 0.0
    %923 = vmatprep.subr.mxu0 0.0
    %924 = vmatpush1.msra.mxu0 0.0
    %925 = vmatprep.subr.mxu0 0.0
    %926 = vmatpush1.msra.mxu0 0.0
    %927 = vmatprep.subr.mxu0 0.0
    %928 = vmatpush1.msra.mxu0 0.0
    %929 = vmatprep.subr.mxu0 0.0
    %930 = vmatpush1.msra.mxu0 0.0
    %931 = vmatprep.subr.mxu0 0.0
    %932 = vmatpush1.msra.mxu0 0.0
    %933 = vmatprep.subr.mxu0 0.0
    %934 = vmatpush1.msra.mxu0 0.0
    %935 = vmatprep.subr.mxu0 0.0
    %936 = vmatpush1.msra.mxu0 0.0
    %937 = vmatprep.subr.mxu0 0.0
    %938 = vmatpush1.msra.mxu0 0.0
    %939 = vmatprep.subr.mxu0 0.0
    %940 = vmatpush1.msra.mxu0 0.0
    %941 = vmatprep.subr.mxu0 0.0
    %942 = vmatpush1.msra.mxu0 0.0
    %943 = vmatprep.subr.mxu0 0.0
    %944 = vmatpush1.msra.mxu0 0.0
    %945 = vmatprep.subr.mxu0 0.0
    %946 = vmatpush1.msra.mxu0 0.0
    %947 = vmatprep.mubr.f32.mxu0 0.0
    %948 = vmatmul.mubr.f32.gmra.mrb[0].mxu0 %v881
    %v949 = vpop.f32.mrb[0].mxu0
    %v950 = vadd.f32 0.0, %v949
    %v951 = vpop.f32.mrb[0].mxu0
    %952 = vdwg.mxu0
    %v954 = vrot.slane %v950, 1
    %v956 = vadd.f32 %v81, %v954
    %v957 = vxor.u32 %v956, 2147483648
    %v958 = vmul.f32 %v957, 1.442695
    %v959 = vpow.pop %v958
    %v960 = vadd.f32 %v959, 1.0
    %v961 = vrcp.pop %v960
    %v962 = vmul.f32 1.0, %v961
    %v963 = vadd.f32 %v950, %v169
    %v965 = vrot.slane %v963, 1
    %966 = vrot.lane.b32.xlu0 %v965, 64
    %v967 = vpop.permute.xlu0 %966
    %v969 = vmul.f32 %v962, %v967
    %971 = vrot.lane.b32.xlu0 %v969, 64
    %v972 = vpop.permute.xlu0 %971
    %v974 = vadd.f32 %v81, %v972
    %v975 = vtanh.pop %v974
    %v976 = vsub.f32 1.0, %v962
    %978 = vrot.lane.b32.xlu0 %v975, 96
    %v979 = vpop.permute.xlu0 %978
    %v981 = vmul.f32 %v976, %v979
    %v982 = vrot.slane %v871, 7
    %v984 = vmul.f32 %v962, %v982
    %v985 = vadd.f32 %v981, %v984
    %987 = vrot.lane.b32.xlu0 %v985, 96
    %v988 = vpop.permute.xlu0 %987
    %vm990 = vcmask 261127
    %991 = vst.msk [vmem:[#allocation2] sm:$0x80] %vm990, %v988
    %v992 = vld [vmem:[%s5] sm:$0x1]
    %v993 = vld [vmem:[#allocation2] sm:$0xff]
    %v994 = vld [vmem:[#allocation3] sm:$0x1]
    %996 = vset.pattern.permute.xlu0 0
    %997 = vperm.xlu0 %996, %v994
    %v998 = vpop.permute.xlu0 %997
    %v1000 = vlaneseq
    %v1001 = vshrl.u32 %v1000, 7
    %v1002 = vsub.s32 0, %v1001
    %v1003 = vrot.slane %v998, %v1002
    %v1005 = vsel %vm82, %v992, 0
    %v1008 = vsel %vm82, %v993, 0
    %1010 = vmatprep.subr.mxu0 0.0
    %1011 = vmatpush1.xpose.msra.mxu0 %v1008
    %1012 = vmatprep.subr.mxu0 0.0
    %1013 = vmatpush1.xpose.msra.mxu0 0.0
    %1014 = vmatprep.subr.mxu0 0.0
    %1015 = vmatpush1.xpose.msra.mxu0 0.0
    %1016 = vmatprep.subr.mxu0 0.0
    %1017 = vmatpush1.xpose.msra.mxu0 0.0
    %1018 = vmatprep.subr.mxu0 0.0
    %1019 = vmatpush1.xpose.msra.mxu0 0.0
    %1020 = vmatprep.subr.mxu0 0.0
    %1021 = vmatpush1.xpose.msra.mxu0 0.0
    %1022 = vmatprep.subr.mxu0 0.0
    %1023 = vmatpush1.xpose.msra.mxu0 0.0
    %1024 = vmatprep.subr.mxu0 0.0
    %1025 = vmatpush1.xpose.msra.mxu0 0.0
    %1026 = vmatprep.subr.mxu0 0.0
    %1027 = vmatpush1.xpose.msra.mxu0 0.0
    %1028 = vmatprep.subr.mxu0 0.0
    %1029 = vmatpush1.xpose.msra.mxu0 0.0
    %1030 = vmatprep.subr.mxu0 0.0
    %1031 = vmatpush1.xpose.msra.mxu0 0.0
    %1032 = vmatprep.subr.mxu0 0.0
    %1033 = vmatpush1.xpose.msra.mxu0 0.0
    %1034 = vmatprep.subr.mxu0 0.0
    %1035 = vmatpush1.xpose.msra.mxu0 0.0
    %1036 = vmatprep.subr.mxu0 0.0
    %1037 = vmatpush1.xpose.msra.mxu0 0.0
    %1038 = vmatprep.subr.mxu0 0.0
    %1039 = vmatpush1.xpose.msra.mxu0 0.0
    %1040 = vmatprep.subr.mxu0 0.0
    %1041 = vmatpush1.xpose.msra.mxu0 0.0
    %1042 = vmatprep.subr.mxu0 0.0
    %1043 = vmatpush1.xpose.msra.mxu0 0.0
    %1044 = vmatprep.subr.mxu0 0.0
    %1045 = vmatpush1.xpose.msra.mxu0 0.0
    %1046 = vmatprep.subr.mxu0 0.0
    %1047 = vmatpush1.xpose.msra.mxu0 0.0
    %1048 = vmatprep.subr.mxu0 0.0
    %1049 = vmatpush1.xpose.msra.mxu0 0.0
    %1050 = vmatprep.subr.mxu0 0.0
    %1051 = vmatpush1.xpose.msra.mxu0 0.0
    %1052 = vmatprep.subr.mxu0 0.0
    %1053 = vmatpush1.xpose.msra.mxu0 0.0
    %1054 = vmatprep.subr.mxu0 0.0
    %1055 = vmatpush1.xpose.msra.mxu0 0.0
    %1056 = vmatprep.subr.mxu0 0.0
    %1057 = vmatpush1.xpose.msra.mxu0 0.0
    %1058 = vmatprep.subr.mxu0 0.0
    %1059 = vmatpush1.xpose.msra.mxu0 0.0
    %1060 = vmatprep.subr.mxu0 0.0
    %1061 = vmatpush1.xpose.msra.mxu0 0.0
    %1062 = vmatprep.subr.mxu0 0.0
    %1063 = vmatpush1.xpose.msra.mxu0 0.0
    %1064 = vmatprep.subr.mxu0 0.0
    %1065 = vmatpush1.xpose.msra.mxu0 0.0
    %1066 = vmatprep.subr.mxu0 0.0
    %1067 = vmatpush1.xpose.msra.mxu0 0.0
    %1068 = vmatprep.subr.mxu0 0.0
    %1069 = vmatpush1.xpose.msra.mxu0 0.0
    %1070 = vmatprep.subr.mxu0 0.0
    %1071 = vmatpush1.xpose.msra.mxu0 0.0
    %1072 = vmatprep.subr.mxu0 0.0
    %1073 = vmatpush1.xpose.msra.mxu0 0.0
    %1074 = vmatprep.mubr.f32.mxu0 0.0
    %1075 = vmatmul.mubr.f32.gmra.mrb[0].mxu0 %v1005
    %v1076 = vpop.f32.mrb[0].mxu0
    %v1077 = vadd.f32 %v1003, %v1076
    %v1078 = vpop.f32.mrb[0].mxu0
    %1079 = vdwg.mxu0
    %vm1080 = vcmask 57344
    %1081 = vst.msk [vmem:[#allocation9] sm:$0x1] %vm1080, %v1077
    // Predicated region
    $region38: #{grunn_forward.1} parent=1 // pred_check
      _
    $region39: #{grunn_forward.1} parent=1 // pred_check_branch
      %1083 = sbr.rel (0) target = $region41
    $region40: #{grunn_forward.1} parent=1 // pred_region
      %s1085 = ssub.s32 16, 16
      %1086 = vsyncadd [#allocation6], %s1085
      %s1088 = sshll.u32 [#allocation9], 4
      %s1089 = int_to_ptr.vmem [resolvable:$true] %s1088
      %1091 = dma.vmem_to_hbm [thread:$0]  %s1089, 16, %s7, [#allocation6]
    $region41: #{grunn_forward.1} parent=1 // pred_fallthru
      _
    // Predicated region
    $region42: #{grunn_forward.1} parent=1 // pred_check
      _
    $region43: #{grunn_forward.1} parent=1 // pred_check_branch
      %1093 = sbr.rel (0) target = $region45
    $region44: #{grunn_forward.1} parent=1 // pred_region
      %1094 = dma.done [#allocation6], 16
    $region45: #{grunn_forward.1} parent=1 // pred_fallthru
      _
    %1095 = vsyncpa [#allocation5], 1
    %1096 = vsyncpa [#allocation8], 1
    %1097 = vsyncpa [#allocation6], 1

</llo_original>
